<compile_context>
chip_gen: v7x
topology: tpu7x:2x2x1
jax: 0.10.0
libtpu: 0.0.40
codegen_flags: <defaults>
</compile_context>

<pallas_src>
import functools

import jax
import jax.numpy as jnp
from jax import lax
from jax.experimental import pallas as pl
from jax.experimental.pallas import tpu as pltpu

N_HEAD = 2
D_MODEL = 32
D_HEAD = 8
SCALE = 1.0 / (D_HEAD ** 0.5)
LN_EPS = 1e-5
NEG_INF = -1e30  # finite "minus infinity" (avoids inf-inf -> NaN on masked rows)


# --------------------------------------------------------------------------
# Kernel: one (batch b, head h) grid step.
#   inputs : per-batch activation blocks, per-head weight blocks (via index_map)
#   scratch: (qlen, d_model) f32 accumulator of projected head outputs
#   output : written once per batch at the last head (residual + LayerNorm)
# --------------------------------------------------------------------------
def _rel_attn_kernel(
    w_ref, cat_ref, r_ref, qw_ref, kw_ref, vw_ref, rw_ref,
    rwb_ref, rrb_ref, ow_ref, ln_g_ref, ln_b_ref,
    out_ref, acc_ref,
    *, qlen, klen, rlen, scale, causal):
  f32 = jnp.float32
  bf16 = jnp.bfloat16
  nn = (((1,), (0,)), ((), ()))   # A @ B
  nt = (((1,), (1,)), ((), ()))   # A @ B.T

  h = pl.program_id(1)

  @pl.when(h == 0)
  def _init():
    acc_ref[...] = jnp.zeros_like(acc_ref)

  w_bf = w_ref[...].astype(bf16)        # (qlen, d_model)
  cat_bf = cat_ref[...].astype(bf16)    # (klen, d_model)

  # --- per-head projections (bf16 MXU inputs, f32 accumulation) ---
  q_h = lax.dot_general(w_bf, qw_ref[...], nn, preferred_element_type=f32)     # (qlen, dh)
  k_bf = lax.dot_general(cat_bf, kw_ref[...], nn,
                         preferred_element_type=f32).astype(bf16)              # (klen, dh)
  v_bf = lax.dot_general(cat_bf, vw_ref[...], nn,
                         preferred_element_type=f32).astype(bf16)              # (klen, dh)
  rk_bf = lax.dot_general(r_ref[...], rw_ref[...], nn,
                          preferred_element_type=f32).astype(bf16)             # (rlen, dh)

  # bias add + attention scale in f32, then back to bf16 for the score matmuls
  q_rw = ((q_h + rwb_ref[...]) * scale).astype(bf16)
  q_rr = ((q_h + rrb_ref[...]) * scale).astype(bf16)

  ac = lax.dot_general(q_rw, k_bf, nt, preferred_element_type=f32)             # (qlen, klen)
  bd = lax.dot_general(q_rr, rk_bf, nt, preferred_element_type=f32)            # (qlen, rlen)

  # --- rel_shift: out[i, j] = bd[i, j + qlen - 1 - i], wrapped region zeroed ---
  # O(log2 qlen) barrel shifter: static circular rolls + per-row bit selects.
  ii = lax.broadcasted_iota(jnp.int32, (qlen, klen), 0)
  jj = lax.broadcasted_iota(jnp.int32, (qlen, klen), 1)
  lshift = (qlen - 1) - ii                      # per-row left-roll amount in [0, qlen-1]
  bit = 1
  while bit < qlen:
    rolled = jnp.roll(bd, shift=-bit, axis=1)   # static shift -> slices + concat
    bd = jnp.where(jnp.bitwise_and(lshift, bit) != 0, rolled, bd)
    bit <<= 1
  src = jj + (qlen - 1) - ii
  bd = jnp.where(src < rlen, bd, 0.0)           # wrap region == causally-masked region

  score = ac + bd
  if causal:
    # canonical Transformer-XL mask: j > i + mlen  (mlen = klen - qlen), built in-kernel
    score = jnp.where(jj > ii + (klen - qlen), NEG_INF, score)

  # --- softmax (f32) ---
  m = jnp.max(score, axis=-1, keepdims=True)
  p = jnp.exp(score - m)
  s = jnp.sum(p, axis=-1, keepdims=True)
  p = p * pl.reciprocal(s, approx=True)         # EUP reciprocal (free slot)

  av = lax.dot_general(p.astype(bf16), v_bf, nn, preferred_element_type=f32)   # (qlen, dh)
  acc_ref[...] += lax.dot_general(av.astype(bf16), ow_ref[...], nn,
                                  preferred_element_type=f32)                  # (qlen, dm)

  @pl.when(h == pl.num_programs(1) - 1)
  def _finalize():
    # post-LN path: residual + LayerNorm, f32
    z = w_ref[...] + acc_ref[...]
    mu = jnp.mean(z, axis=-1, keepdims=True)
    var = jnp.mean(jnp.square(z - mu), axis=-1, keepdims=True)
    out_ref[...] = ((z - mu) * lax.rsqrt(var + LN_EPS)) * ln_g_ref[...] + ln_b_ref[...]


# --------------------------------------------------------------------------
# Wrapper: layout glue + one pallas_call over grid (bsz, n_head).
# --------------------------------------------------------------------------
@functools.partial(jax.jit, static_argnames=("causal",))
def _forward_impl(w, cat, r, params, *, causal):
  qlen, bsz, d_model = w.shape
  klen = cat.shape[0]
  rlen = r.shape[0]
  assert rlen == klen, "canonical Transformer-XL usage requires rlen == klen"
  n_head, d_head = N_HEAD, D_HEAD
  hd = n_head * d_head
  bf16 = jnp.bfloat16

  # batch-major activation views (residual path stays f32)
  # TODO(synk): at production sizes keep activations batch-major end-to-end instead of
  #             paying a per-call transpose here and on the way out.
  w_b = jnp.transpose(w, (1, 0, 2))       # (bsz, qlen, d_model)
  cat_b = jnp.transpose(cat, (1, 0, 2))   # (bsz, klen, d_model)

  def per_head(wmat):  # (d_model, hd) -> (n_head, d_model, d_head), bf16
    return jnp.transpose(wmat.reshape(d_model, n_head, d_head), (1, 0, 2)).astype(bf16)

  qkv = params["qkv_w_t"]
  qw = per_head(qkv[:, :hd])
  kw = per_head(qkv[:, hd:2 * hd])
  vw = per_head(qkv[:, 2 * hd:])
  rw = per_head(params["r_w_t"])
  ow = params["o_w_t"].reshape(n_head, d_head, d_model).astype(bf16)
  rwb = params["r_w_bias"].reshape(n_head, 1, d_head).astype(jnp.float32)
  rrb = params["r_r_bias"].reshape(n_head, 1, d_head).astype(jnp.float32)
  ln_g = params["ln_g"].reshape(1, d_model).astype(jnp.float32)
  ln_b = params["ln_b"].reshape(1, d_model).astype(jnp.float32)
  r_bf = r.astype(bf16)

  kernel = functools.partial(
      _rel_attn_kernel, qlen=qlen, klen=klen, rlen=rlen, scale=SCALE, causal=causal)

  batch_act = lambda b, h: (b, 0, 0)
  head_w = lambda b, h: (h, 0, 0)
  const2 = lambda b, h: (0, 0)

  out = pl.pallas_call(
      kernel,
      out_shape=jax.ShapeDtypeStruct((bsz, qlen, d_model), jnp.float32),
      grid=(bsz, n_head),
      in_specs=[
          pl.BlockSpec((None, qlen, d_model), batch_act),   # w (per batch)
          pl.BlockSpec((None, klen, d_model), batch_act),   # cat = [mems; w] (per batch)
          pl.BlockSpec((rlen, d_model), const2),            # r (resident)
          pl.BlockSpec((None, d_model, d_head), head_w),    # q weight (per head)
          pl.BlockSpec((None, d_model, d_head), head_w),    # k weight (per head)
          pl.BlockSpec((None, d_model, d_head), head_w),    # v weight (per head)
          pl.BlockSpec((None, d_model, d_head), head_w),    # r weight (per head)
          pl.BlockSpec((None, 1, d_head), head_w),          # r_w_bias (per head)
          pl.BlockSpec((None, 1, d_head), head_w),          # r_r_bias (per head)
          pl.BlockSpec((None, d_head, d_model), head_w),    # o weight (per head)
          pl.BlockSpec((1, d_model), const2),               # LayerNorm gamma
          pl.BlockSpec((1, d_model), const2),               # LayerNorm beta
      ],
      out_specs=pl.BlockSpec((None, qlen, d_model), batch_act),
      scratch_shapes=[pltpu.VMEM((qlen, d_model), jnp.float32)],
      compiler_params=pltpu.CompilerParams(
          dimension_semantics=("parallel", "arbitrary")),
  )(w_b, cat_b, r_bf, qw, kw, vw, rw, rwb, rrb, ow, ln_g, ln_b)

  return jnp.transpose(out, (1, 0, 2))


def rel_multihead_attn_forward(w, r, params, attn_mask=None, mems=None):
  cat = w if mems is None else jnp.concatenate([mems, w], axis=0)
  return _forward_impl(w, cat, r, params, causal=attn_mask is not None)


# --------------------------------------------------------------------------
# Pure-jnp reference (mirrors the torch einsum / pad-view rel_shift exactly)
# --------------------------------------------------------------------------
def reference_forward(w, r, params, attn_mask):
  qlen, bsz, _ = w.shape
  klen, rlen = qlen, r.shape[0]
  w_heads = w @ params["qkv_w_t"]
  r_head_k = (r @ params["r_w_t"]).reshape(rlen, N_HEAD, D_HEAD)
  w_head_q, w_head_k, w_head_v = jnp.split(w_heads, 3, axis=-1)
  w_head_q = w_head_q.reshape(qlen, bsz, N_HEAD, D_HEAD)
  w_head_k = w_head_k.reshape(klen, bsz, N_HEAD, D_HEAD)
  w_head_v = w_head_v.reshape(klen, bsz, N_HEAD, D_HEAD)
  AC = jnp.einsum('ibnd,jbnd->ijbn', w_head_q + params["r_w_bias"], w_head_k)
  BD = jnp.einsum('ibnd,jnd->ijbn', w_head_q + params["r_r_bias"], r_head_k)
  zp = jnp.zeros((qlen, 1, bsz, N_HEAD), BD.dtype)
  xp = jnp.concatenate([zp, BD], axis=1).reshape(rlen + 1, qlen, bsz, N_HEAD)
  BD = xp[1:].reshape(qlen, rlen, bsz, N_HEAD)
  score = (AC + BD) * SCALE
  score = jnp.where(attn_mask[:, :, None, None] > 0, -jnp.inf, score)
  prob = jax.nn.softmax(score, axis=1)
  vec = jnp.einsum('ijbn,jbnd->ibnd', prob, w_head_v)
  vec = vec.reshape(qlen, bsz, N_HEAD * D_HEAD)
  out = vec @ params["o_w_t"]
  z = w + out
  mu = z.mean(-1, keepdims=True)
  var = ((z - mu) ** 2).mean(-1, keepdims=True)
  return (z - mu) / jnp.sqrt(var + LN_EPS) * params["ln_g"] + params["ln_b"]


if __name__ == "__main__":
  qlen, bsz = 8, 2
  rlen = qlen  # mems=None -> klen == qlen == rlen

  key = jax.random.PRNGKey(0)
  ks = jax.random.split(key, 8)
  # weights stored pre-transposed (in_features, out_features) == torch weight.T
  params = {
      "qkv_w_t": 0.05 * jax.random.normal(ks[0], (D_MODEL, 3 * N_HEAD * D_HEAD), jnp.float32),
      "o_w_t":   0.05 * jax.random.normal(ks[1], (N_HEAD * D_HEAD, D_MODEL), jnp.float32),
      "r_w_t":   0.05 * jax.random.normal(ks[2], (D_MODEL, N_HEAD * D_HEAD), jnp.float32),
      "r_w_bias": 0.02 * jax.random.normal(ks[3], (N_HEAD, D_HEAD), jnp.float32),
      "r_r_bias": 0.02 * jax.random.normal(ks[4], (N_HEAD, D_HEAD), jnp.float32),
      "ln_g": jnp.ones((D_MODEL,), jnp.float32),
      "ln_b": jnp.zeros((D_MODEL,), jnp.float32),
  }

  w = jax.random.normal(ks[5], (qlen, bsz, D_MODEL), jnp.float32)
  r = jax.random.normal(ks[6], (rlen, D_MODEL), jnp.float32)
  attn_mask = jnp.triu(jnp.ones((qlen, qlen), jnp.int32), k=1)  # causal

  out = rel_multihead_attn_forward(w, r, params, attn_mask=attn_mask, mems=None)
  out = jax.block_until_ready(out)

  ref = reference_forward(w, r, params, attn_mask)
  if not bool(jnp.allclose(out, ref, atol=1e-2, rtol=1e-2)):
    err = float(jnp.max(jnp.abs(out - ref)))
    raise AssertionError(f"Pallas output does not match reference (max abs err {err})")

  print("KERNEL_OK")
</pallas_src>

<mosaic_0001>
module attributes {stable_mosaic.version = 11 : i64} {
  func.func @_rel_attn_kernel(%arg0: i32, %arg1: i32, %arg2: memref<1x8x32xf32, #tpu.memory_space<vmem>>, %arg3: memref<1x8x32xf32, #tpu.memory_space<vmem>>, %arg4: memref<8x32xbf16, #tpu.memory_space<vmem>>, %arg5: memref<1x32x8xbf16, #tpu.memory_space<vmem>>, %arg6: memref<1x32x8xbf16, #tpu.memory_space<vmem>>, %arg7: memref<1x32x8xbf16, #tpu.memory_space<vmem>>, %arg8: memref<1x32x8xbf16, #tpu.memory_space<vmem>>, %arg9: memref<1x1x8xf32, #tpu.memory_space<vmem>>, %arg10: memref<1x1x8xf32, #tpu.memory_space<vmem>>, %arg11: memref<1x8x32xbf16, #tpu.memory_space<vmem>>, %arg12: memref<1x32xf32, #tpu.memory_space<vmem>>, %arg13: memref<1x32xf32, #tpu.memory_space<vmem>>, %arg14: memref<1x8x32xf32, #tpu.memory_space<vmem>>, %arg15: memref<8x32xf32, #tpu.memory_space<vmem>>) attributes {dimension_semantics = [#tpu.dimension_semantics<parallel>, #tpu.dimension_semantics<arbitrary>], iteration_bounds = array<i64: 2, 2>, scalar_prefetch = 0 : i64, scratch_operands = 1 : i64, tpu.core_type = #tpu.core_type<tc>, window_params = [{transform_indices = @transform_0, window_bounds = array<i64: 1, 8, 32>}, {transform_indices = @transform_1, window_bounds = array<i64: 1, 8, 32>}, {pipeline_mode = #tpu.pipeline_mode<synchronous>, transform_indices = @transform_2, window_bounds = array<i64: 8, 32>}, {transform_indices = @transform_3, window_bounds = array<i64: 1, 32, 8>}, {transform_indices = @transform_4, window_bounds = array<i64: 1, 32, 8>}, {transform_indices = @transform_5, window_bounds = array<i64: 1, 32, 8>}, {transform_indices = @transform_6, window_bounds = array<i64: 1, 32, 8>}, {transform_indices = @transform_7, window_bounds = array<i64: 1, 1, 8>}, {transform_indices = @transform_8, window_bounds = array<i64: 1, 1, 8>}, {transform_indices = @transform_9, window_bounds = array<i64: 1, 8, 32>}, {pipeline_mode = #tpu.pipeline_mode<synchronous>, transform_indices = @transform_10, window_bounds = array<i64: 1, 32>}, {pipeline_mode = #tpu.pipeline_mode<synchronous>, transform_indices = @transform_11, window_bounds = array<i64: 1, 32>}, {transform_indices = @transform_12, window_bounds = array<i64: 1, 8, 32>}]} {
    %c0_i32 = arith.constant 0 : i32
    %0 = arith.cmpi eq, %arg1, %c0_i32 : i32
    %1 = arith.extui %0 : i1 to i32
    %c0_i32_0 = arith.constant 0 : i32
    %2 = arith.cmpi ne, %1, %c0_i32_0 : i32
    scf.if %2 {
      %cst_53 = arith.constant 0.000000e+00 : f32
      %104 = vector.broadcast %cst_53 : f32 to vector<8x32xf32>
      %c0_54 = arith.constant 0 : index
      %c0_55 = arith.constant 0 : index
      %105 = vector.load %arg15[%c0_54, %c0_55] : memref<8x32xf32, #tpu.memory_space<vmem>>, vector<8x32xf32>
      tpu.vector_store %arg15[%c0_54, %c0_55], %104 {strides = array<i32>} : memref<8x32xf32, #tpu.memory_space<vmem>>, vector<8x32xf32>,
    } else {
    }
    %c0 = arith.constant 0 : index
    %c0_1 = arith.constant 0 : index
    %c0_2 = arith.constant 0 : index
    %3 = vector.load %arg2[%c0, %c0_1, %c0_2] : memref<1x8x32xf32, #tpu.memory_space<vmem>>, vector<1x8x32xf32>
    %4 = vector.shape_cast %3 : vector<1x8x32xf32> to vector<8x32xf32>
    %5 = arith.truncf %4 : vector<8x32xf32> to vector<8x32xbf16>
    %c0_3 = arith.constant 0 : index
    %c0_4 = arith.constant 0 : index
    %c0_5 = arith.constant 0 : index
    %6 = vector.load %arg3[%c0_3, %c0_4, %c0_5] : memref<1x8x32xf32, #tpu.memory_space<vmem>>, vector<1x8x32xf32>
    %7 = vector.shape_cast %6 : vector<1x8x32xf32> to vector<8x32xf32>
    %8 = arith.truncf %7 : vector<8x32xf32> to vector<8x32xbf16>
    %c0_6 = arith.constant 0 : index
    %c0_7 = arith.constant 0 : index
    %c0_8 = arith.constant 0 : index
    %9 = vector.load %arg5[%c0_6, %c0_7, %c0_8] : memref<1x32x8xbf16, #tpu.memory_space<vmem>>, vector<1x32x8xbf16>
    %10 = vector.shape_cast %9 : vector<1x32x8xbf16> to vector<32x8xbf16>
    %cst = arith.constant dense<0.000000e+00> : vector<8x8xf32>
    %11 = tpu.matmul %5, %10, %cst {dimension_numbers = #tpu.dot_dimension_numbers<[1], [0], [0], [1], [0, 0, 1, 1], [], []>} : vector<8x32xbf16>, vector<32x8xbf16>, vector<8x8xf32> -> vector<8x8xf32>
    %c0_9 = arith.constant 0 : index
    %c0_10 = arith.constant 0 : index
    %c0_11 = arith.constant 0 : index
    %12 = vector.load %arg6[%c0_9, %c0_10, %c0_11] : memref<1x32x8xbf16, #tpu.memory_space<vmem>>, vector<1x32x8xbf16>
    %13 = vector.shape_cast %12 : vector<1x32x8xbf16> to vector<32x8xbf16>
    %cst_12 = arith.constant dense<0.000000e+00> : vector<8x8xf32>
    %14 = tpu.matmul %8, %13, %cst_12 {dimension_numbers = #tpu.dot_dimension_numbers<[1], [0], [0], [1], [0, 0, 1, 1], [], []>} : vector<8x32xbf16>, vector<32x8xbf16>, vector<8x8xf32> -> vector<8x8xf32>
    %15 = arith.truncf %14 : vector<8x8xf32> to vector<8x8xbf16>
    %c0_13 = arith.constant 0 : index
    %c0_14 = arith.constant 0 : index
    %c0_15 = arith.constant 0 : index
    %16 = vector.load %arg7[%c0_13, %c0_14, %c0_15] : memref<1x32x8xbf16, #tpu.memory_space<vmem>>, vector<1x32x8xbf16>
    %17 = vector.shape_cast %16 : vector<1x32x8xbf16> to vector<32x8xbf16>
    %cst_16 = arith.constant dense<0.000000e+00> : vector<8x8xf32>
    %18 = tpu.matmul %8, %17, %cst_16 {dimension_numbers = #tpu.dot_dimension_numbers<[1], [0], [0], [1], [0, 0, 1, 1], [], []>} : vector<8x32xbf16>, vector<32x8xbf16>, vector<8x8xf32> -> vector<8x8xf32>
    %19 = arith.truncf %18 : vector<8x8xf32> to vector<8x8xbf16>
    %c0_17 = arith.constant 0 : index
    %c0_18 = arith.constant 0 : index
    %20 = vector.load %arg4[%c0_17, %c0_18] : memref<8x32xbf16, #tpu.memory_space<vmem>>, vector<8x32xbf16>
    %c0_19 = arith.constant 0 : index
    %c0_20 = arith.constant 0 : index
    %c0_21 = arith.constant 0 : index
    %21 = vector.load %arg8[%c0_19, %c0_20, %c0_21] : memref<1x32x8xbf16, #tpu.memory_space<vmem>>, vector<1x32x8xbf16>
    %22 = vector.shape_cast %21 : vector<1x32x8xbf16> to vector<32x8xbf16>
    %cst_22 = arith.constant dense<0.000000e+00> : vector<8x8xf32>
    %23 = tpu.matmul %20, %22, %cst_22 {dimension_numbers = #tpu.dot_dimension_numbers<[1], [0], [0], [1], [0, 0, 1, 1], [], []>} : vector<8x32xbf16>, vector<32x8xbf16>, vector<8x8xf32> -> vector<8x8xf32>
    %24 = arith.truncf %23 : vector<8x8xf32> to vector<8x8xbf16>
    %c0_23 = arith.constant 0 : index
    %c0_24 = arith.constant 0 : index
    %c0_25 = arith.constant 0 : index
    %25 = vector.load %arg9[%c0_23, %c0_24, %c0_25] : memref<1x1x8xf32, #tpu.memory_space<vmem>>, vector<1x1x8xf32>
    %26 = vector.shape_cast %25 : vector<1x1x8xf32> to vector<1x8xf32>
    %27 = vector.broadcast %26 : vector<1x8xf32> to vector<8x8xf32>
    %28 = arith.addf %11, %27 : vector<8x8xf32>
    %cst_26 = arith.constant 0.353553385 : f32
    %29 = vector.broadcast %cst_26 : f32 to vector<8x8xf32>
    %30 = arith.mulf %28, %29 : vector<8x8xf32>
    %31 = arith.truncf %30 : vector<8x8xf32> to vector<8x8xbf16>
    %c0_27 = arith.constant 0 : index
    %c0_28 = arith.constant 0 : index
    %c0_29 = arith.constant 0 : index
    %32 = vector.load %arg10[%c0_27, %c0_28, %c0_29] : memref<1x1x8xf32, #tpu.memory_space<vmem>>, vector<1x1x8xf32>
    %33 = vector.shape_cast %32 : vector<1x1x8xf32> to vector<1x8xf32>
    %34 = vector.broadcast %33 : vector<1x8xf32> to vector<8x8xf32>
    %35 = arith.addf %11, %34 : vector<8x8xf32>
    %cst_30 = arith.constant 0.353553385 : f32
    %36 = vector.broadcast %cst_30 : f32 to vector<8x8xf32>
    %37 = arith.mulf %35, %36 : vector<8x8xf32>
    %38 = arith.truncf %37 : vector<8x8xf32> to vector<8x8xbf16>
    %cst_31 = arith.constant dense<0.000000e+00> : vector<8x8xf32>
    %39 = tpu.matmul %31, %15, %cst_31 {dimension_numbers = #tpu.dot_dimension_numbers<[1], [1], [0], [0], [0, 0, 1, 0], [], []>} : vector<8x8xbf16>, vector<8x8xbf16>, vector<8x8xf32> -> vector<8x8xf32>
    %cst_32 = arith.constant dense<0.000000e+00> : vector<8x8xf32>
    %40 = tpu.matmul %38, %24, %cst_32 {dimension_numbers = #tpu.dot_dimension_numbers<[1], [1], [0], [0], [0, 0, 1, 0], [], []>} : vector<8x8xbf16>, vector<8x8xbf16>, vector<8x8xf32> -> vector<8x8xf32>
    %41 = tpu.iota {dimensions = array<i32: 0>} : vector<8x8xi32>
    %42 = tpu.iota {dimensions = array<i32: 1>} : vector<8x8xi32>
    %c7_i32 = arith.constant 7 : i32
    %43 = vector.broadcast %c7_i32 : i32 to vector<8x8xi32>
    %44 = arith.subi %43, %41 : vector<8x8xi32>
    %45 = vector.extract_strided_slice %40 {offsets = [0, 1], sizes = [8, 7], strides = [1, 1]} : vector<8x8xf32> to vector<8x7xf32>
    %46 = vector.extract_strided_slice %40 {offsets = [0, 0], sizes = [8, 1], strides = [1, 1]} : vector<8x8xf32> to vector<8x1xf32>
    %47 = tpu.concatenate %45, %46 in 1 : vector<8x7xf32>, vector<8x1xf32> -> vector<8x8xf32>
    %c1_i32 = arith.constant 1 : i32
    %48 = vector.broadcast %c1_i32 : i32 to vector<8x8xi32>
    %49 = arith.andi %44, %48 : vector<8x8xi32>
    %c0_i32_33 = arith.constant 0 : i32
    %50 = vector.broadcast %c0_i32_33 : i32 to vector<8x8xi32>
    %51 = arith.cmpi ne, %49, %50 : vector<8x8xi32>
    %52 = arith.select %51, %47, %40 : vector<8x8xi1>, vector<8x8xf32>
    %53 = vector.extract_strided_slice %52 {offsets = [0, 2], sizes = [8, 6], strides = [1, 1]} : vector<8x8xf32> to vector<8x6xf32>
    %54 = vector.extract_strided_slice %52 {offsets = [0, 0], sizes = [8, 2], strides = [1, 1]} : vector<8x8xf32> to vector<8x2xf32>
    %55 = tpu.concatenate %53, %54 in 1 : vector<8x6xf32>, vector<8x2xf32> -> vector<8x8xf32>
    %c2_i32 = arith.constant 2 : i32
    %56 = vector.broadcast %c2_i32 : i32 to vector<8x8xi32>
    %57 = arith.andi %44, %56 : vector<8x8xi32>
    %c0_i32_34 = arith.constant 0 : i32
    %58 = vector.broadcast %c0_i32_34 : i32 to vector<8x8xi32>
    %59 = arith.cmpi ne, %57, %58 : vector<8x8xi32>
    %60 = arith.select %59, %55, %52 : vector<8x8xi1>, vector<8x8xf32>
    %61 = vector.extract_strided_slice %60 {offsets = [0, 4], sizes = [8, 4], strides = [1, 1]} : vector<8x8xf32> to vector<8x4xf32>
    %62 = vector.extract_strided_slice %60 {offsets = [0, 0], sizes = [8, 4], strides = [1, 1]} : vector<8x8xf32> to vector<8x4xf32>
    %63 = tpu.concatenate %61, %62 in 1 : vector<8x4xf32>, vector<8x4xf32> -> vector<8x8xf32>
    %c4_i32 = arith.constant 4 : i32
    %64 = vector.broadcast %c4_i32 : i32 to vector<8x8xi32>
    %65 = arith.andi %44, %64 : vector<8x8xi32>
    %c0_i32_35 = arith.constant 0 : i32
    %66 = vector.broadcast %c0_i32_35 : i32 to vector<8x8xi32>
    %67 = arith.cmpi ne, %65, %66 : vector<8x8xi32>
    %68 = arith.select %67, %63, %60 : vector<8x8xi1>, vector<8x8xf32>
    %c7_i32_36 = arith.constant 7 : i32
    %69 = vector.broadcast %c7_i32_36 : i32 to vector<8x8xi32>
    %70 = arith.addi %42, %69 : vector<8x8xi32>
    %71 = arith.subi %70, %41 : vector<8x8xi32>
    %c8_i32 = arith.constant 8 : i32
    %72 = vector.broadcast %c8_i32 : i32 to vector<8x8xi32>
    %73 = arith.cmpi slt, %71, %72 : vector<8x8xi32>
    %cst_37 = arith.constant 0.000000e+00 : f32
    %74 = vector.broadcast %cst_37 : f32 to vector<8x8xf32>
    %75 = arith.select %73, %68, %74 : vector<8x8xi1>, vector<8x8xf32>
    %76 = arith.addf %39, %75 : vector<8x8xf32>
    %c0_i32_38 = arith.constant 0 : i32
    %77 = vector.broadcast %c0_i32_38 : i32 to vector<8x8xi32>
    %78 = arith.addi %41, %77 : vector<8x8xi32>
    %79 = arith.cmpi sgt, %42, %78 : vector<8x8xi32>
    %cst_39 = arith.constant -1.000000e+30 : f32
    %80 = vector.broadcast %cst_39 : f32 to vector<8x8xf32>
    %81 = arith.select %79, %80, %76 : vector<8x8xi1>, vector<8x8xf32>
    %cst_40 = arith.constant dense<0xFF800000> : vector<8xf32>
    %82 = vector.multi_reduction <maximumf>, %81, %cst_40 [1] : vector<8x8xf32> to vector<8xf32>
    %83 = vector.shape_cast %82 : vector<8xf32> to vector<8x1xf32>
    %84 = vector.broadcast %83 : vector<8x1xf32> to vector<8x8xf32>
    %85 = arith.subf %81, %84 : vector<8x8xf32>
    %86 = math.exp %85 : vector<8x8xf32>
    %cst_41 = arith.constant dense<0.000000e+00> : vector<8xf32>
    %87 = vector.multi_reduction <add>, %86, %cst_41 [1] : vector<8x8xf32> to vector<8xf32>
    %88 = vector.shape_cast %87 : vector<8xf32> to vector<8x1xf32>
    %89 = tpu.reciprocal %88 {approx = true} : vector<8x1xf32> -> vector<8x1xf32>
    %90 = vector.broadcast %89 : vector<8x1xf32> to vector<8x8xf32>
    %91 = arith.mulf %86, %90 : vector<8x8xf32>
    %92 = arith.truncf %91 : vector<8x8xf32> to vector<8x8xbf16>
    %cst_42 = arith.constant dense<0.000000e+00> : vector<8x8xf32>
    %93 = tpu.matmul %92, %19, %cst_42 {dimension_numbers = #tpu.dot_dimension_numbers<[1], [0], [0], [1], [0, 0, 1, 1], [], []>} : vector<8x8xbf16>, vector<8x8xbf16>, vector<8x8xf32> -> vector<8x8xf32>
    %c0_43 = arith.constant 0 : index
    %c0_44 = arith.constant 0 : index
    %94 = vector.load %arg15[%c0_43, %c0_44] : memref<8x32xf32, #tpu.memory_space<vmem>>, vector<8x32xf32>
    %95 = arith.truncf %93 : vector<8x8xf32> to vector<8x8xbf16>
    %c0_45 = arith.constant 0 : index
    %c0_46 = arith.constant 0 : index
    %c0_47 = arith.constant 0 : index
    %96 = vector.load %arg11[%c0_45, %c0_46, %c0_47] : memref<1x8x32xbf16, #tpu.memory_space<vmem>>, vector<1x8x32xbf16>
    %97 = vector.shape_cast %96 : vector<1x8x32xbf16> to vector<8x32xbf16>
    %cst_48 = arith.constant dense<0.000000e+00> : vector<8x32xf32>
    %98 = tpu.matmul %95, %97, %cst_48 {dimension_numbers = #tpu.dot_dimension_numbers<[1], [0], [0], [1], [0, 0, 1, 1], [], []>} : vector<8x8xbf16>, vector<8x32xbf16>, vector<8x32xf32> -> vector<8x32xf32>
    %99 = arith.addf %94, %98 : vector<8x32xf32>
    %c0_49 = arith.constant 0 : index
    %c0_50 = arith.constant 0 : index
    %100 = vector.load %arg15[%c0_49, %c0_50] : memref<8x32xf32, #tpu.memory_space<vmem>>, vector<8x32xf32>
    tpu.vector_store %arg15[%c0_49, %c0_50], %99 {strides = array<i32>} : memref<8x32xf32, #tpu.memory_space<vmem>>, vector<8x32xf32>,
    %c1_i32_51 = arith.constant 1 : i32
    %101 = arith.cmpi eq, %arg1, %c1_i32_51 : i32
    %102 = arith.extui %101 : i1 to i32
    %c0_i32_52 = arith.constant 0 : i32
    %103 = arith.cmpi ne, %102, %c0_i32_52 : i32
    scf.if %103 {
      %c0_53 = arith.constant 0 : index
      %c0_54 = arith.constant 0 : index
      %c0_55 = arith.constant 0 : index
      %104 = vector.load %arg2[%c0_53, %c0_54, %c0_55] : memref<1x8x32xf32, #tpu.memory_space<vmem>>, vector<1x8x32xf32>
      %105 = vector.shape_cast %104 : vector<1x8x32xf32> to vector<8x32xf32>
      %c0_56 = arith.constant 0 : index
      %c0_57 = arith.constant 0 : index
      %106 = vector.load %arg15[%c0_56, %c0_57] : memref<8x32xf32, #tpu.memory_space<vmem>>, vector<8x32xf32>
      %107 = arith.addf %105, %106 : vector<8x32xf32>
      %cst_58 = arith.constant dense<0.000000e+00> : vector<8xf32>
      %108 = vector.multi_reduction <add>, %107, %cst_58 [1] : vector<8x32xf32> to vector<8xf32>
      %109 = vector.shape_cast %108 : vector<8xf32> to vector<8x1xf32>
      %cst_59 = arith.constant 3.200000e+01 : f32
      %110 = vector.broadcast %cst_59 : f32 to vector<8x1xf32>
      %111 = arith.divf %109, %110 : vector<8x1xf32>
      %112 = vector.broadcast %111 : vector<8x1xf32> to vector<8x32xf32>
      %113 = arith.subf %107, %112 : vector<8x32xf32>
      %114 = arith.mulf %113, %113 : vector<8x32xf32>
      %cst_60 = arith.constant dense<0.000000e+00> : vector<8xf32>
      %115 = vector.multi_reduction <add>, %114, %cst_60 [1] : vector<8x32xf32> to vector<8xf32>
      %116 = vector.shape_cast %115 : vector<8xf32> to vector<8x1xf32>
      %cst_61 = arith.constant 3.200000e+01 : f32
      %117 = vector.broadcast %cst_61 : f32 to vector<8x1xf32>
      %118 = arith.divf %116, %117 : vector<8x1xf32>
      %119 = vector.broadcast %111 : vector<8x1xf32> to vector<8x32xf32>
      %120 = arith.subf %107, %119 : vector<8x32xf32>
      %cst_62 = arith.constant 9.99999974E-6 : f32
      %121 = vector.broadcast %cst_62 : f32 to vector<8x1xf32>
      %122 = arith.addf %118, %121 : vector<8x1xf32>
      %123 = math.rsqrt %122 : vector<8x1xf32>
      %124 = vector.broadcast %123 : vector<8x1xf32> to vector<8x32xf32>
      %125 = arith.mulf %120, %124 : vector<8x32xf32>
      %c0_63 = arith.constant 0 : index
      %c0_64 = arith.constant 0 : index
      %126 = vector.load %arg12[%c0_63, %c0_64] : memref<1x32xf32, #tpu.memory_space<vmem>>, vector<1x32xf32>
      %127 = vector.broadcast %126 : vector<1x32xf32> to vector<8x32xf32>
      %128 = arith.mulf %125, %127 : vector<8x32xf32>
      %c0_65 = arith.constant 0 : index
      %c0_66 = arith.constant 0 : index
      %129 = vector.load %arg13[%c0_65, %c0_66] : memref<1x32xf32, #tpu.memory_space<vmem>>, vector<1x32xf32>
      %130 = vector.broadcast %129 : vector<1x32xf32> to vector<8x32xf32>
      %131 = arith.addf %128, %130 : vector<8x32xf32>
      %c0_67 = arith.constant 0 : index
      %c0_68 = arith.constant 0 : index
      %c0_69 = arith.constant 0 : index
      %132 = vector.load %arg14[%c0_67, %c0_68, %c0_69] : memref<1x8x32xf32, #tpu.memory_space<vmem>>, vector<1x8x32xf32>
      %133 = vector.shape_cast %132 : vector<1x8x32xf32> to vector<8x32xf32>
      %134 = vector.shape_cast %131 : vector<8x32xf32> to vector<1x8x32xf32>
      tpu.vector_store %arg14[%c0_67, %c0_68, %c0_69], %134 {strides = array<i32>} : memref<1x8x32xf32, #tpu.memory_space<vmem>>, vector<1x8x32xf32>,
    } else {
    }
    return
  }
  func.func @transform_0(%arg0: i32, %arg1: i32) -> (i32, i32, i32) {
    %c0_i32 = arith.constant 0 : i32
    %c0_i32_0 = arith.constant 0 : i32
    %c0_i32_1 = arith.constant 0 : i32
    return %arg0, %c0_i32, %c0_i32_0 : i32, i32, i32
  }
  func.func @transform_1(%arg0: i32, %arg1: i32) -> (i32, i32, i32) {
    %c0_i32 = arith.constant 0 : i32
    %c0_i32_0 = arith.constant 0 : i32
    %c0_i32_1 = arith.constant 0 : i32
    return %arg0, %c0_i32, %c0_i32_0 : i32, i32, i32
  }
  func.func @transform_2(%arg0: i32, %arg1: i32) -> (i32, i32) {
    %c0_i32 = arith.constant 0 : i32
    %c0_i32_0 = arith.constant 0 : i32
    %c0_i32_1 = arith.constant 0 : i32
    return %c0_i32, %c0_i32_0 : i32, i32
  }
  func.func @transform_3(%arg0: i32, %arg1: i32) -> (i32, i32, i32) {
    %c0_i32 = arith.constant 0 : i32
    %c0_i32_0 = arith.constant 0 : i32
    %c0_i32_1 = arith.constant 0 : i32
    return %arg1, %c0_i32, %c0_i32_0 : i32, i32, i32
  }
  func.func @transform_4(%arg0: i32, %arg1: i32) -> (i32, i32, i32) {
    %c0_i32 = arith.constant 0 : i32
    %c0_i32_0 = arith.constant 0 : i32
    %c0_i32_1 = arith.constant 0 : i32
    return %arg1, %c0_i32, %c0_i32_0 : i32, i32, i32
  }
  func.func @transform_5(%arg0: i32, %arg1: i32) -> (i32, i32, i32) {
    %c0_i32 = arith.constant 0 : i32
    %c0_i32_0 = arith.constant 0 : i32
    %c0_i32_1 = arith.constant 0 : i32
    return %arg1, %c0_i32, %c0_i32_0 : i32, i32, i32
  }
  func.func @transform_6(%arg0: i32, %arg1: i32) -> (i32, i32, i32) {
    %c0_i32 = arith.constant 0 : i32
    %c0_i32_0 = arith.constant 0 : i32
    %c0_i32_1 = arith.constant 0 : i32
    return %arg1, %c0_i32, %c0_i32_0 : i32, i32, i32
  }
  func.func @transform_7(%arg0: i32, %arg1: i32) -> (i32, i32, i32) {
    %c0_i32 = arith.constant 0 : i32
    %c0_i32_0 = arith.constant 0 : i32
    %c0_i32_1 = arith.constant 0 : i32
    return %arg1, %c0_i32, %c0_i32_0 : i32, i32, i32
  }
  func.func @transform_8(%arg0: i32, %arg1: i32) -> (i32, i32, i32) {
    %c0_i32 = arith.constant 0 : i32
    %c0_i32_0 = arith.constant 0 : i32
    %c0_i32_1 = arith.constant 0 : i32
    return %arg1, %c0_i32, %c0_i32_0 : i32, i32, i32
  }
  func.func @transform_9(%arg0: i32, %arg1: i32) -> (i32, i32, i32) {
    %c0_i32 = arith.constant 0 : i32
    %c0_i32_0 = arith.constant 0 : i32
    %c0_i32_1 = arith.constant 0 : i32
    return %arg1, %c0_i32, %c0_i32_0 : i32, i32, i32
  }
  func.func @transform_10(%arg0: i32, %arg1: i32) -> (i32, i32) {
    %c0_i32 = arith.constant 0 : i32
    %c0_i32_0 = arith.constant 0 : i32
    %c0_i32_1 = arith.constant 0 : i32
    return %c0_i32, %c0_i32_0 : i32, i32
  }
  func.func @transform_11(%arg0: i32, %arg1: i32) -> (i32, i32) {
    %c0_i32 = arith.constant 0 : i32
    %c0_i32_0 = arith.constant 0 : i32
    %c0_i32_1 = arith.constant 0 : i32
    return %c0_i32, %c0_i32_0 : i32, i32
  }
  func.func @transform_12(%arg0: i32, %arg1: i32) -> (i32, i32, i32) {
    %c0_i32 = arith.constant 0 : i32
    %c0_i32_0 = arith.constant 0 : i32
    %c0_i32_1 = arith.constant 0 : i32
    return %arg0, %c0_i32, %c0_i32_0 : i32, i32, i32
  }
}

</mosaic_0001>

<llo_original>
// kernel: _forward_impl.1
$region0: #{_forward_impl.1}
  #allocation0 [shape = 'u32[]', space=smem, size = 0x4, offset = 0x4, fixed_abs, tag = 'smem constant byte address 0x4 - core index']
  #allocation1 [shape = 'u32[144,128]{1,0:T(1,128)}', space=vmem, size = 0x12000, scoped, tag = 'internal scratch']
  #allocation2 [shape = 'f32[8,32]{1,0:T(8,128)}', space=vmem, size = 0x1000, scoped, tag = 'scratch operand']
  %s0 = inlined_call_operand.vmem [shape: f32[2,8,32], index: 0, kind: input, shape index: {}]
  %s1 = inlined_call_operand.vmem [shape: f32[2,8,32], index: 1, kind: input, shape index: {}]
  %s2 = inlined_call_operand.vmem [shape: bf16[8,32], index: 2, kind: input, shape index: {}]
  %s3 = inlined_call_operand.vmem [shape: bf16[2,32,8], index: 3, kind: input, shape index: {}]
  %s4 = inlined_call_operand.vmem [shape: bf16[2,32,8], index: 4, kind: input, shape index: {}]
  %s5 = inlined_call_operand.vmem [shape: bf16[2,32,8], index: 5, kind: input, shape index: {}]
  %s6 = inlined_call_operand.vmem [shape: bf16[2,32,8], index: 6, kind: input, shape index: {}]
  %s7 = inlined_call_operand.vmem [shape: f32[2,1,8], index: 7, kind: input, shape index: {}]
  %s8 = inlined_call_operand.vmem [shape: f32[2,1,8], index: 8, kind: input, shape index: {}]
  %s9 = inlined_call_operand.vmem [shape: bf16[2,8,32], index: 9, kind: input, shape index: {}]
  %s10 = inlined_call_operand.vmem [shape: f32[1,32], index: 10, kind: input, shape index: {}]
  %s11 = inlined_call_operand.vmem [shape: f32[1,32], index: 11, kind: input, shape index: {}]
  %s12 = inlined_call_operand.vmem [shape: f32[2,8,32], index: 12, kind: output, shape index: {}]
  %s13 = sld [smem:[#allocation0]]
  $region89: #{_forward_impl.1} parent=0
    _
  %s15 = ssub.s32 1, %s13
  %s16 = scalar_select 0, %s15, %s13
  loop: start=0, step=1, limit=6
  $region2: #{_forward_impl.1} parent=0 // loop_pre_header
    _
  $region3: #{_forward_impl.1} parent=0 // loop_header
    %s18 = sphi 0, %s22
    %p19 = scmp.ge.s32.totalorder %s18, 6
    %s25 = sphi 0, %s37
    %s26 = sphi 0, %s33
    %s27 = sphi 0, %s25
    %s28 = sphi 0, %s26
    %s29 = sphi 0, %s27
    %s30 = sphi 0, %s28
    %s40 = sphi 0, %s42
    %s43 = sphi 0, %s40
    %s44 = sphi 0, %s43
    %s60 = sphi 0, %s44
    %s66 = sphi 0, %s68
    %s69 = sphi 0, %s66
    %s70 = sphi 0, %s69
    %s86 = sphi 0, %s70
    %s90 = sphi 0, %s90
    %s92 = sphi 0, %s90
    %s93 = sphi 0, %s92
    %s107 = sphi 0, %s93
    %s113 = sphi 0, %s115
    %s116 = sphi 0, %s113
    %s117 = sphi 0, %s116
    %s133 = sphi 0, %s117
    %s139 = sphi 0, %s141
    %s142 = sphi 0, %s139
    %s143 = sphi 0, %s142
    %s159 = sphi 0, %s143
    %s165 = sphi 0, %s167
    %s168 = sphi 0, %s165
    %s169 = sphi 0, %s168
    %s185 = sphi 0, %s169
    %s191 = sphi 0, %s193
    %s194 = sphi 0, %s191
    %s195 = sphi 0, %s194
    %s211 = sphi 0, %s195
    %s217 = sphi 0, %s219
    %s220 = sphi 0, %s217
    %s221 = sphi 0, %s220
    %s237 = sphi 0, %s221
    %s243 = sphi 0, %s245
    %s246 = sphi 0, %s243
    %s247 = sphi 0, %s246
    %s263 = sphi 0, %s247
    %s269 = sphi 0, %s271
    %s272 = sphi 0, %s269
    %s273 = sphi 0, %s272
    %s289 = sphi 0, %s273
    %s293 = sphi 0, %s293
    %s295 = sphi 0, %s293
    %s296 = sphi 0, %s295
    %s310 = sphi 0, %s296
    %s314 = sphi 0, %s314
    %s316 = sphi 0, %s314
    %s317 = sphi 0, %s316
    %s331 = sphi 0, %s317
    %s337 = sphi 0, %s339
    %s340 = sphi 0, %s337
    %s341 = sphi 0, %s340
    %s357 = sphi 0, %s341
  $region4: #{_forward_impl.1} parent=0 // loop_header_branch
    %21 = sbr.rel (%p19) target = $region8
  $region5: #{_forward_impl.1} parent=0 // loop_body
    %s23 = ssub.s32 %s18, 1
    %s24 = ssub.s32 %s18, 2
    %s31 = sadd.s32 1, %s26
    %p32 = scmp.ge.s32.totalorder %s31, 2
    %s33 = scalar_select %p32, 0, %s31
    %s34 = sadd.s32 1, %s25
    %s35 = scalar_select %p32, %s34, %s25
    %p36 = scmp.ge.s32.totalorder %s35, 2
    %s37 = scalar_select %p36, 0, %s35
    %s38 = ssub.s32 %s25, %s37
    %p39 = scmp.eq.s32.totalorder %s38, 0
    %s41 = sadd.s32 %s40, 1
    %s42 = scalar_select %p39, %s40, %s41
    %p45 = pneg %p39
    %p46 = scmp.eq.s32.totalorder %s18, 3
    %p47 = por %p45, %p46
    %p48 = scmp.ne.s32.totalorder %s40, %s43
    %p49 = scmp.eq.s32.totalorder %s18, 0
    %p50 = por %p48, %p49
    %p51 = scmp.ne.s32.totalorder %s40, %s43
    %p52 = scmp.eq.s32.totalorder %s23, 3
    %p53 = por %p51, %p52
    %p54 = scmp.ne.s32.totalorder %s43, %s44
    %p55 = scmp.eq.s32.totalorder %s23, 0
    %p56 = por %p54, %p55
    %p57 = scmp.ne.s32.totalorder %s43, %s44
    %p58 = scmp.eq.s32.totalorder %s24, 3
    %p59 = por %p57, %p58
    %p61 = scmp.ne.s32.totalorder %s44, %s60
    %p62 = scmp.eq.s32.totalorder %s24, 0
    %p63 = por %p61, %p62
    %s64 = ssub.s32 %s25, %s37
    %p65 = scmp.eq.s32.totalorder %s64, 0
    %s67 = sadd.s32 %s66, 1
    %s68 = scalar_select %p65, %s66, %s67
    %p71 = pneg %p65
    %p72 = scmp.eq.s32.totalorder %s18, 3
    %p73 = por %p71, %p72
    %p74 = scmp.ne.s32.totalorder %s66, %s69
    %p75 = scmp.eq.s32.totalorder %s18, 0
    %p76 = por %p74, %p75
    %p77 = scmp.ne.s32.totalorder %s66, %s69
    %p78 = scmp.eq.s32.totalorder %s23, 3
    %p79 = por %p77, %p78
    %p80 = scmp.ne.s32.totalorder %s69, %s70
    %p81 = scmp.eq.s32.totalorder %s23, 0
    %p82 = por %p80, %p81
    %p83 = scmp.ne.s32.totalorder %s69, %s70
    %p84 = scmp.eq.s32.totalorder %s24, 3
    %p85 = por %p83, %p84
    %p87 = scmp.ne.s32.totalorder %s70, %s86
    %p88 = scmp.eq.s32.totalorder %s24, 0
    %p89 = por %p87, %p88
    %s91 = sadd.s32 %s90, 1
    %p94 = scmp.eq.s32.totalorder %s18, 3
    %p95 = scmp.ne.s32.totalorder %s90, %s92
    %p96 = scmp.eq.s32.totalorder %s18, 0
    %p97 = por %p95, %p96
    %p98 = scmp.ne.s32.totalorder %s90, %s92
    %p99 = scmp.eq.s32.totalorder %s23, 3
    %p100 = por %p98, %p99
    %p101 = scmp.ne.s32.totalorder %s92, %s93
    %p102 = scmp.eq.s32.totalorder %s23, 0
    %p103 = por %p101, %p102
    %p104 = scmp.ne.s32.totalorder %s92, %s93
    %p105 = scmp.eq.s32.totalorder %s24, 3
    %p106 = por %p104, %p105
    %p108 = scmp.ne.s32.totalorder %s93, %s107
    %p109 = scmp.eq.s32.totalorder %s24, 0
    %p110 = por %p108, %p109
    %s111 = ssub.s32 %s26, %s33
    %p112 = scmp.eq.s32.totalorder %s111, 0
    %s114 = sadd.s32 %s113, 1
    %s115 = scalar_select %p112, %s113, %s114
    %p118 = pneg %p112
    %p119 = scmp.eq.s32.totalorder %s18, 3
    %p120 = por %p118, %p119
    %p121 = scmp.ne.s32.totalorder %s113, %s116
    %p122 = scmp.eq.s32.totalorder %s18, 0
    %p123 = por %p121, %p122
    %p124 = scmp.ne.s32.totalorder %s113, %s116
    %p125 = scmp.eq.s32.totalorder %s23, 3
    %p126 = por %p124, %p125
    %p127 = scmp.ne.s32.totalorder %s116, %s117
    %p128 = scmp.eq.s32.totalorder %s23, 0
    %p129 = por %p127, %p128
    %p130 = scmp.ne.s32.totalorder %s116, %s117
    %p131 = scmp.eq.s32.totalorder %s24, 3
    %p132 = por %p130, %p131
    %p134 = scmp.ne.s32.totalorder %s117, %s133
    %p135 = scmp.eq.s32.totalorder %s24, 0
    %p136 = por %p134, %p135
    %s137 = ssub.s32 %s26, %s33
    %p138 = scmp.eq.s32.totalorder %s137, 0
    %s140 = sadd.s32 %s139, 1
    %s141 = scalar_select %p138, %s139, %s140
    %p144 = pneg %p138
    %p145 = scmp.eq.s32.totalorder %s18, 3
    %p146 = por %p144, %p145
    %p147 = scmp.ne.s32.totalorder %s139, %s142
    %p148 = scmp.eq.s32.totalorder %s18, 0
    %p149 = por %p147, %p148
    %p150 = scmp.ne.s32.totalorder %s139, %s142
    %p151 = scmp.eq.s32.totalorder %s23, 3
    %p152 = por %p150, %p151
    %p153 = scmp.ne.s32.totalorder %s142, %s143
    %p154 = scmp.eq.s32.totalorder %s23, 0
    %p155 = por %p153, %p154
    %p156 = scmp.ne.s32.totalorder %s142, %s143
    %p157 = scmp.eq.s32.totalorder %s24, 3
    %p158 = por %p156, %p157
    %p160 = scmp.ne.s32.totalorder %s143, %s159
    %p161 = scmp.eq.s32.totalorder %s24, 0
    %p162 = por %p160, %p161
    %s163 = ssub.s32 %s26, %s33
    %p164 = scmp.eq.s32.totalorder %s163, 0
    %s166 = sadd.s32 %s165, 1
    %s167 = scalar_select %p164, %s165, %s166
    %p170 = pneg %p164
    %p171 = scmp.eq.s32.totalorder %s18, 3
    %p172 = por %p170, %p171
    %p173 = scmp.ne.s32.totalorder %s165, %s168
    %p174 = scmp.eq.s32.totalorder %s18, 0
    %p175 = por %p173, %p174
    %p176 = scmp.ne.s32.totalorder %s165, %s168
    %p177 = scmp.eq.s32.totalorder %s23, 3
    %p178 = por %p176, %p177
    %p179 = scmp.ne.s32.totalorder %s168, %s169
    %p180 = scmp.eq.s32.totalorder %s23, 0
    %p181 = por %p179, %p180
    %p182 = scmp.ne.s32.totalorder %s168, %s169
    %p183 = scmp.eq.s32.totalorder %s24, 3
    %p184 = por %p182, %p183
    %p186 = scmp.ne.s32.totalorder %s169, %s185
    %p187 = scmp.eq.s32.totalorder %s24, 0
    %p188 = por %p186, %p187
    %s189 = ssub.s32 %s26, %s33
    %p190 = scmp.eq.s32.totalorder %s189, 0
    %s192 = sadd.s32 %s191, 1
    %s193 = scalar_select %p190, %s191, %s192
    %p196 = pneg %p190
    %p197 = scmp.eq.s32.totalorder %s18, 3
    %p198 = por %p196, %p197
    %p199 = scmp.ne.s32.totalorder %s191, %s194
    %p200 = scmp.eq.s32.totalorder %s18, 0
    %p201 = por %p199, %p200
    %p202 = scmp.ne.s32.totalorder %s191, %s194
    %p203 = scmp.eq.s32.totalorder %s23, 3
    %p204 = por %p202, %p203
    %p205 = scmp.ne.s32.totalorder %s194, %s195
    %p206 = scmp.eq.s32.totalorder %s23, 0
    %p207 = por %p205, %p206
    %p208 = scmp.ne.s32.totalorder %s194, %s195
    %p209 = scmp.eq.s32.totalorder %s24, 3
    %p210 = por %p208, %p209
    %p212 = scmp.ne.s32.totalorder %s195, %s211
    %p213 = scmp.eq.s32.totalorder %s24, 0
    %p214 = por %p212, %p213
    %s215 = ssub.s32 %s26, %s33
    %p216 = scmp.eq.s32.totalorder %s215, 0
    %s218 = sadd.s32 %s217, 1
    %s219 = scalar_select %p216, %s217, %s218
    %p222 = pneg %p216
    %p223 = scmp.eq.s32.totalorder %s18, 3
    %p224 = por %p222, %p223
    %p225 = scmp.ne.s32.totalorder %s217, %s220
    %p226 = scmp.eq.s32.totalorder %s18, 0
    %p227 = por %p225, %p226
    %p228 = scmp.ne.s32.totalorder %s217, %s220
    %p229 = scmp.eq.s32.totalorder %s23, 3
    %p230 = por %p228, %p229
    %p231 = scmp.ne.s32.totalorder %s220, %s221
    %p232 = scmp.eq.s32.totalorder %s23, 0
    %p233 = por %p231, %p232
    %p234 = scmp.ne.s32.totalorder %s220, %s221
    %p235 = scmp.eq.s32.totalorder %s24, 3
    %p236 = por %p234, %p235
    %p238 = scmp.ne.s32.totalorder %s221, %s237
    %p239 = scmp.eq.s32.totalorder %s24, 0
    %p240 = por %p238, %p239
    %s241 = ssub.s32 %s26, %s33
    %p242 = scmp.eq.s32.totalorder %s241, 0
    %s244 = sadd.s32 %s243, 1
    %s245 = scalar_select %p242, %s243, %s244
    %p248 = pneg %p242
    %p249 = scmp.eq.s32.totalorder %s18, 3
    %p250 = por %p248, %p249
    %p251 = scmp.ne.s32.totalorder %s243, %s246
    %p252 = scmp.eq.s32.totalorder %s18, 0
    %p253 = por %p251, %p252
    %p254 = scmp.ne.s32.totalorder %s243, %s246
    %p255 = scmp.eq.s32.totalorder %s23, 3
    %p256 = por %p254, %p255
    %p257 = scmp.ne.s32.totalorder %s246, %s247
    %p258 = scmp.eq.s32.totalorder %s23, 0
    %p259 = por %p257, %p258
    %p260 = scmp.ne.s32.totalorder %s246, %s247
    %p261 = scmp.eq.s32.totalorder %s24, 3
    %p262 = por %p260, %p261
    %p264 = scmp.ne.s32.totalorder %s247, %s263
    %p265 = scmp.eq.s32.totalorder %s24, 0
    %p266 = por %p264, %p265
    %s267 = ssub.s32 %s26, %s33
    %p268 = scmp.eq.s32.totalorder %s267, 0
    %s270 = sadd.s32 %s269, 1
    %s271 = scalar_select %p268, %s269, %s270
    %p274 = pneg %p268
    %p275 = scmp.eq.s32.totalorder %s18, 3
    %p276 = por %p274, %p275
    %p277 = scmp.ne.s32.totalorder %s269, %s272
    %p278 = scmp.eq.s32.totalorder %s18, 0
    %p279 = por %p277, %p278
    %p280 = scmp.ne.s32.totalorder %s269, %s272
    %p281 = scmp.eq.s32.totalorder %s23, 3
    %p282 = por %p280, %p281
    %p283 = scmp.ne.s32.totalorder %s272, %s273
    %p284 = scmp.eq.s32.totalorder %s23, 0
    %p285 = por %p283, %p284
    %p286 = scmp.ne.s32.totalorder %s272, %s273
    %p287 = scmp.eq.s32.totalorder %s24, 3
    %p288 = por %p286, %p287
    %p290 = scmp.ne.s32.totalorder %s273, %s289
    %p291 = scmp.eq.s32.totalorder %s24, 0
    %p292 = por %p290, %p291
    %s294 = sadd.s32 %s293, 1
    %p297 = scmp.eq.s32.totalorder %s18, 3
    %p298 = scmp.ne.s32.totalorder %s293, %s295
    %p299 = scmp.eq.s32.totalorder %s18, 0
    %p300 = por %p298, %p299
    %p301 = scmp.ne.s32.totalorder %s293, %s295
    %p302 = scmp.eq.s32.totalorder %s23, 3
    %p303 = por %p301, %p302
    %p304 = scmp.ne.s32.totalorder %s295, %s296
    %p305 = scmp.eq.s32.totalorder %s23, 0
    %p306 = por %p304, %p305
    %p307 = scmp.ne.s32.totalorder %s295, %s296
    %p308 = scmp.eq.s32.totalorder %s24, 3
    %p309 = por %p307, %p308
    %p311 = scmp.ne.s32.totalorder %s296, %s310
    %p312 = scmp.eq.s32.totalorder %s24, 0
    %p313 = por %p311, %p312
    %s315 = sadd.s32 %s314, 1
    %p318 = scmp.eq.s32.totalorder %s18, 3
    %p319 = scmp.ne.s32.totalorder %s314, %s316
    %p320 = scmp.eq.s32.totalorder %s18, 0
    %p321 = por %p319, %p320
    %p322 = scmp.ne.s32.totalorder %s314, %s316
    %p323 = scmp.eq.s32.totalorder %s23, 3
    %p324 = por %p322, %p323
    %p325 = scmp.ne.s32.totalorder %s316, %s317
    %p326 = scmp.eq.s32.totalorder %s23, 0
    %p327 = por %p325, %p326
    %p328 = scmp.ne.s32.totalorder %s316, %s317
    %p329 = scmp.eq.s32.totalorder %s24, 3
    %p330 = por %p328, %p329
    %p332 = scmp.ne.s32.totalorder %s317, %s331
    %p333 = scmp.eq.s32.totalorder %s24, 0
    %p334 = por %p332, %p333
    %s335 = ssub.s32 %s25, %s37
    %p336 = scmp.eq.s32.totalorder %s335, 0
    %s338 = sadd.s32 %s337, 1
    %s339 = scalar_select %p336, %s337, %s338
    %p342 = pneg %p336
    %p343 = scmp.eq.s32.totalorder %s18, 3
    %p344 = por %p342, %p343
    %p345 = scmp.ne.s32.totalorder %s337, %s340
    %p346 = scmp.eq.s32.totalorder %s18, 0
    %p347 = por %p345, %p346
    %p348 = scmp.ne.s32.totalorder %s337, %s340
    %p349 = scmp.eq.s32.totalorder %s23, 3
    %p350 = por %p348, %p349
    %p351 = scmp.ne.s32.totalorder %s340, %s341
    %p352 = scmp.eq.s32.totalorder %s23, 0
    %p353 = por %p351, %p352
    %p354 = scmp.ne.s32.totalorder %s340, %s341
    %p355 = scmp.eq.s32.totalorder %s24, 3
    %p356 = por %p354, %p355
    %p358 = scmp.ne.s32.totalorder %s341, %s357
    %p359 = scmp.eq.s32.totalorder %s24, 0
    %p360 = por %p358, %p359
    %p361 = scmp.le.s32.totalorder 1, %s18
    %p362 = scmp.lt.s32.totalorder %s18, 5
    %p363 = pnand %p361, %p362
    %p364 = pneg %p363
    // Predicated region
    $region9: #{_forward_impl.1} parent=5 // pred_check
      _
    $region10: #{_forward_impl.1} parent=5 // pred_check_branch
      %366 = sbr.rel (%p363) target = $region12
    $region11: #{_forward_impl.1} parent=5 // pred_region
      %s367 = ssub.s32 %s18, 1
      // Predicated region
      $region13: #{_forward_impl.1} parent=11 // pred_check
        %p368 = pneg %p103
      $region14: #{_forward_impl.1} parent=11 // pred_check_branch
        %370 = sbr.rel (%p368) target = $region16
      $region15: #{_forward_impl.1} parent=11 // pred_region
        _
      $region16: #{_forward_impl.1} parent=11 // pred_fallthru
        _
      // Predicated region
      $region17: #{_forward_impl.1} parent=11 // pred_check
        %p371 = pneg %p306
      $region18: #{_forward_impl.1} parent=11 // pred_check_branch
        %373 = sbr.rel (%p371) target = $region20
      $region19: #{_forward_impl.1} parent=11 // pred_region
        _
      $region20: #{_forward_impl.1} parent=11 // pred_fallthru
        _
      // Predicated region
      $region21: #{_forward_impl.1} parent=11 // pred_check
        %p374 = pneg %p327
      $region22: #{_forward_impl.1} parent=11 // pred_check_branch
        %376 = sbr.rel (%p374) target = $region24
      $region23: #{_forward_impl.1} parent=11 // pred_region
        _
      $region24: #{_forward_impl.1} parent=11 // pred_fallthru
        _
    $region12: #{_forward_impl.1} parent=5 // pred_fallthru
      _
    %p377 = scmp.lt.s32.totalorder %s18, 4
    // Predicated region
    $region25: #{_forward_impl.1} parent=5 // pred_check
      %p378 = pneg %p377
    $region26: #{_forward_impl.1} parent=5 // pred_check_branch
      %380 = sbr.rel (%p378) target = $region28
    $region27: #{_forward_impl.1} parent=5 // pred_region
      // Predicated region
      $region29: #{_forward_impl.1} parent=27 // pred_check
        %p381 = pneg %p50
      $region30: #{_forward_impl.1} parent=27 // pred_check_branch
        %383 = sbr.rel (%p381) target = $region32
      $region31: #{_forward_impl.1} parent=27 // pred_region
        %p384 = scmp.lt.s32.totalorder %s25, 1
        %s385 = scalar_select %p384, %s25, 1
        %s386 = smul.addr %s385, 8
        %s387 = scalar_lea.vmem %s0, %s386
      $region32: #{_forward_impl.1} parent=27 // pred_fallthru
        _
      // Predicated region
      $region33: #{_forward_impl.1} parent=27 // pred_check
        %p388 = pneg %p76
      $region34: #{_forward_impl.1} parent=27 // pred_check_branch
        %390 = sbr.rel (%p388) target = $region36
      $region35: #{_forward_impl.1} parent=27 // pred_region
        %p391 = scmp.lt.s32.totalorder %s25, 1
        %s392 = scalar_select %p391, %s25, 1
        %s393 = smul.addr %s392, 8
        %s394 = scalar_lea.vmem %s1, %s393
      $region36: #{_forward_impl.1} parent=27 // pred_fallthru
        _
      // Predicated region
      $region37: #{_forward_impl.1} parent=27 // pred_check
        %p395 = pneg %p123
      $region38: #{_forward_impl.1} parent=27 // pred_check_branch
        %397 = sbr.rel (%p395) target = $region40
      $region39: #{_forward_impl.1} parent=27 // pred_region
        %p398 = scmp.lt.s32.totalorder %s26, 1
        %s399 = scalar_select %p398, %s26, 1
        %s400 = smul.addr %s399, 4
        %s401 = smul.addr %s400, 4
        %s402 = scalar_lea.vmem %s3, %s401
      $region40: #{_forward_impl.1} parent=27 // pred_fallthru
        _
      // Predicated region
      $region41: #{_forward_impl.1} parent=27 // pred_check
        %p403 = pneg %p149
      $region42: #{_forward_impl.1} parent=27 // pred_check_branch
        %405 = sbr.rel (%p403) target = $region44
      $region43: #{_forward_impl.1} parent=27 // pred_region
        %p406 = scmp.lt.s32.totalorder %s26, 1
        %s407 = scalar_select %p406, %s26, 1
        %s408 = smul.addr %s407, 4
        %s409 = smul.addr %s408, 4
        %s410 = scalar_lea.vmem %s4, %s409
      $region44: #{_forward_impl.1} parent=27 // pred_fallthru
        _
      // Predicated region
      $region45: #{_forward_impl.1} parent=27 // pred_check
        %p411 = pneg %p175
      $region46: #{_forward_impl.1} parent=27 // pred_check_branch
        %413 = sbr.rel (%p411) target = $region48
      $region47: #{_forward_impl.1} parent=27 // pred_region
        %p414 = scmp.lt.s32.totalorder %s26, 1
        %s415 = scalar_select %p414, %s26, 1
        %s416 = smul.addr %s415, 4
        %s417 = smul.addr %s416, 4
        %s418 = scalar_lea.vmem %s5, %s417
      $region48: #{_forward_impl.1} parent=27 // pred_fallthru
        _
      // Predicated region
      $region49: #{_forward_impl.1} parent=27 // pred_check
        %p419 = pneg %p201
      $region50: #{_forward_impl.1} parent=27 // pred_check_branch
        %421 = sbr.rel (%p419) target = $region52
      $region51: #{_forward_impl.1} parent=27 // pred_region
        %p422 = scmp.lt.s32.totalorder %s26, 1
        %s423 = scalar_select %p422, %s26, 1
        %s424 = smul.addr %s423, 4
        %s425 = smul.addr %s424, 4
        %s426 = scalar_lea.vmem %s6, %s425
      $region52: #{_forward_impl.1} parent=27 // pred_fallthru
        _
      // Predicated region
      $region53: #{_forward_impl.1} parent=27 // pred_check
        %p427 = pneg %p227
      $region54: #{_forward_impl.1} parent=27 // pred_check_branch
        %429 = sbr.rel (%p427) target = $region56
      $region55: #{_forward_impl.1} parent=27 // pred_region
        %p430 = scmp.lt.s32.totalorder %s26, 1
        %s431 = scalar_select %p430, %s26, 1
        %s432 = scalar_lea.vmem %s7, %s431
      $region56: #{_forward_impl.1} parent=27 // pred_fallthru
        _
      // Predicated region
      $region57: #{_forward_impl.1} parent=27 // pred_check
        %p433 = pneg %p253
      $region58: #{_forward_impl.1} parent=27 // pred_check_branch
        %435 = sbr.rel (%p433) target = $region60
      $region59: #{_forward_impl.1} parent=27 // pred_region
        %p436 = scmp.lt.s32.totalorder %s26, 1
        %s437 = scalar_select %p436, %s26, 1
        %s438 = scalar_lea.vmem %s8, %s437
      $region60: #{_forward_impl.1} parent=27 // pred_fallthru
        _
      // Predicated region
      $region61: #{_forward_impl.1} parent=27 // pred_check
        %p439 = pneg %p279
      $region62: #{_forward_impl.1} parent=27 // pred_check_branch
        %441 = sbr.rel (%p439) target = $region64
      $region63: #{_forward_impl.1} parent=27 // pred_region
        %p442 = scmp.lt.s32.totalorder %s26, 1
        %s443 = scalar_select %p442, %s26, 1
        %s444 = smul.addr %s443, 4
        %s445 = scalar_lea.vmem %s9, %s444
      $region64: #{_forward_impl.1} parent=27 // pred_fallthru
        _
    $region28: #{_forward_impl.1} parent=5 // pred_fallthru
      _
    %p446 = scmp.le.s32.totalorder 1, %s18
    %p447 = scmp.lt.s32.totalorder %s18, 5
    %p448 = pnand %p446, %p447
    %p449 = pneg %p448
    // Predicated region
    $region65: #{_forward_impl.1} parent=5 // pred_check
      _
    $region66: #{_forward_impl.1} parent=5 // pred_check_branch
      %451 = sbr.rel (%p448) target = $region68
    $region67: #{_forward_impl.1} parent=5 // pred_region
      %s452 = ssub.s32 %s18, 1
      %p453 = scmp.lt.s32.totalorder %s27, 1
      %s454 = scalar_select %p453, %s27, 1
      %s455 = smul.addr %s454, 8
      %s456 = scalar_lea.vmem %s0, %s455
      %p457 = pneg %p56
      %p458 = pneg %p53
      %p459 = scmp.lt.s32.totalorder %s27, 1
      %s460 = scalar_select %p459, %s27, 1
      %s461 = smul.addr %s460, 8
      %s462 = scalar_lea.vmem %s1, %s461
      %p463 = pneg %p82
      %p464 = pneg %p79
      %p465 = pneg %p103
      %p466 = pneg %p100
      %p467 = scmp.lt.s32.totalorder %s28, 1
      %s468 = scalar_select %p467, %s28, 1
      %s469 = smul.addr %s468, 4
      %s470 = smul.addr %s469, 4
      %s471 = scalar_lea.vmem %s3, %s470
      %p472 = pneg %p129
      %p473 = pneg %p126
      %p474 = scmp.lt.s32.totalorder %s28, 1
      %s475 = scalar_select %p474, %s28, 1
      %s476 = smul.addr %s475, 4
      %s477 = smul.addr %s476, 4
      %s478 = scalar_lea.vmem %s4, %s477
      %p479 = pneg %p155
      %p480 = pneg %p152
      %p481 = scmp.lt.s32.totalorder %s28, 1
      %s482 = scalar_select %p481, %s28, 1
      %s483 = smul.addr %s482, 4
      %s484 = smul.addr %s483, 4
      %s485 = scalar_lea.vmem %s5, %s484
      %p486 = pneg %p181
      %p487 = pneg %p178
      %p488 = scmp.lt.s32.totalorder %s28, 1
      %s489 = scalar_select %p488, %s28, 1
      %s490 = smul.addr %s489, 4
      %s491 = smul.addr %s490, 4
      %s492 = scalar_lea.vmem %s6, %s491
      %p493 = pneg %p207
      %p494 = pneg %p204
      %p495 = scmp.lt.s32.totalorder %s28, 1
      %s496 = scalar_select %p495, %s28, 1
      %s497 = scalar_lea.vmem %s7, %s496
      %p498 = pneg %p233
      %p499 = pneg %p230
      %p500 = scmp.lt.s32.totalorder %s28, 1
      %s501 = scalar_select %p500, %s28, 1
      %s502 = scalar_lea.vmem %s8, %s501
      %p503 = pneg %p259
      %p504 = pneg %p256
      %p505 = scmp.lt.s32.totalorder %s28, 1
      %s506 = scalar_select %p505, %s28, 1
      %s507 = smul.addr %s506, 4
      %s508 = scalar_lea.vmem %s9, %s507
      %p509 = pneg %p285
      %p510 = pneg %p282
      %p511 = pneg %p306
      %p512 = pneg %p303
      %p513 = pneg %p327
      %p514 = pneg %p324
      %p515 = pneg %p353
      %p516 = pneg %p350
      %p517 = scmp.lt.s32.totalorder %s27, 1
      %s518 = scalar_select %p517, %s27, 1
      %s519 = smul.addr %s518, 8
      %s520 = scalar_lea.vmem %s12, %s519
      %p521 = scmp.lt.s32.totalorder %s27, 1
      %s522 = scalar_select %p521, %s27, 1
      %s523 = smul.addr %s522, 8
      %s524 = scalar_lea.vmem %s0, %s523
      %p525 = scmp.lt.s32.totalorder %s27, 1
      %s526 = scalar_select %p525, %s27, 1
      %s527 = smul.addr %s526, 8
      %s528 = scalar_lea.vmem %s1, %s527
      %p529 = scmp.lt.s32.totalorder %s28, 1
      %s530 = scalar_select %p529, %s28, 1
      %s531 = smul.addr %s530, 4
      %s532 = smul.addr %s531, 4
      %s533 = scalar_lea.vmem %s3, %s532
      %p534 = scmp.lt.s32.totalorder %s28, 1
      %s535 = scalar_select %p534, %s28, 1
      %s536 = smul.addr %s535, 4
      %s537 = smul.addr %s536, 4
      %s538 = scalar_lea.vmem %s4, %s537
      %p539 = scmp.lt.s32.totalorder %s28, 1
      %s540 = scalar_select %p539, %s28, 1
      %s541 = smul.addr %s540, 4
      %s542 = smul.addr %s541, 4
      %s543 = scalar_lea.vmem %s5, %s542
      %p544 = scmp.lt.s32.totalorder %s28, 1
      %s545 = scalar_select %p544, %s28, 1
      %s546 = smul.addr %s545, 4
      %s547 = smul.addr %s546, 4
      %s548 = scalar_lea.vmem %s6, %s547
      %p549 = scmp.lt.s32.totalorder %s28, 1
      %s550 = scalar_select %p549, %s28, 1
      %s551 = scalar_lea.vmem %s7, %s550
      %p552 = scmp.lt.s32.totalorder %s28, 1
      %s553 = scalar_select %p552, %s28, 1
      %s554 = scalar_lea.vmem %s8, %s553
      %p555 = scmp.lt.s32.totalorder %s28, 1
      %s556 = scalar_select %p555, %s28, 1
      %s557 = smul.addr %s556, 4
      %s558 = scalar_lea.vmem %s9, %s557
      %p559 = scmp.lt.s32.totalorder %s27, 1
      %s560 = scalar_select %p559, %s27, 1
      %s561 = smul.addr %s560, 8
      %s562 = scalar_lea.vmem %s12, %s561
      %p564 = scmp.eq.s32.totalorder %s28, 0
      // Predicated region
      $region69: #{_forward_impl.1} parent=67 // pred_check
        %p565 = pneg %p564
      $region70: #{_forward_impl.1} parent=67 // pred_check_branch
        %567 = sbr.rel (%p565) target = $region72
      $region71: #{_forward_impl.1} parent=67 // pred_region
        %vm568 = vcmask 261120
        %569 = vst.msk [vmem:[#allocation2] sm:$0xff] %vm568, 0.0
      $region72: #{_forward_impl.1} parent=67 // pred_fallthru
        _
      %v570 = vld [vmem:[%s524] sm:$0xff]
      %v571 = vpack.c.bf16 %v570, %v570
      %v572 = vld [vmem:[%s528] sm:$0xff]
      %v573 = vpack.c.bf16 %v572, %v572
      %v574 = vld [vmem:[%s533] sm:$0xf]
      %v575 = vld [vmem:[%s533 + $0x4] sm:$0xf]
      %v576 = vld [vmem:[%s533 + $0x8] sm:$0xf]
      %v577 = vld [vmem:[%s533 + $0xc] sm:$0xf]
      %v582 = vunpack.c.l.b16 %v574
      %v583 = vunpack.c.l.b16 %v575
      %v584 = vunpack.c.l.b16 %v576
      %v585 = vunpack.c.l.b16 %v577
      %v586 = vpack.c.b16 %v583, %v582
      %v587 = vpack.c.b16 %v585, %v584
      %vm590 = vcmask 261120
      %v592 = vsel %vm590, %v571, 0
      %594 = vmatprep.subr.bf16.mxu0 0
      %595 = vmatpush1.bf16.msra.mxu0 %v586
      %596 = vmatprep.subr.bf16.mxu0 0
      %597 = vmatpush1.bf16.msra.mxu0 %v587
      %598 = vmatprep.subr.bf16.mxu0 0
      %599 = vmatpush1.bf16.msra.mxu0 0
      %600 = vmatprep.subr.bf16.mxu0 0
      %601 = vmatpush1.bf16.msra.mxu0 0
      %602 = vmatprep.subr.bf16.mxu0 0
      %603 = vmatpush1.bf16.msra.mxu0 0
      %604 = vmatprep.subr.bf16.mxu0 0
      %605 = vmatpush1.bf16.msra.mxu0 0
      %606 = vmatprep.subr.bf16.mxu0 0
      %607 = vmatpush1.bf16.msra.mxu0 0
      %608 = vmatprep.subr.bf16.mxu0 0
      %609 = vmatpush1.bf16.msra.mxu0 0
      %610 = vmatprep.subr.bf16.mxu0 0
      %611 = vmatpush1.bf16.msra.mxu0 0
      %612 = vmatprep.subr.bf16.mxu0 0
      %613 = vmatpush1.bf16.msra.mxu0 0
      %614 = vmatprep.subr.bf16.mxu0 0
      %615 = vmatpush1.bf16.msra.mxu0 0
      %616 = vmatprep.subr.bf16.mxu0 0
      %617 = vmatpush1.bf16.msra.mxu0 0
      %618 = vmatprep.subr.bf16.mxu0 0
      %619 = vmatpush1.bf16.msra.mxu0 0
      %620 = vmatprep.subr.bf16.mxu0 0
      %621 = vmatpush1.bf16.msra.mxu0 0
      %622 = vmatprep.subr.bf16.mxu0 0
      %623 = vmatpush1.bf16.msra.mxu0 0
      %624 = vmatprep.subr.bf16.mxu0 0
      %625 = vmatpush1.bf16.msra.mxu0 0
      %626 = vmatprep.mubr.bf16.mxu0 0
      %627 = vmatmul.mubr.bf16.gmra.mrb[0].mxu0 %v592
      %v628 = vpop.f32.mrb[0].mxu0
      %v629 = vadd.f32 0.0, %v628
      %v630 = vpop.f32.mrb[0].mxu0
      %v631 = vpop.f32.mrb[0].mxu0
      %v632 = vpop.f32.mrb[0].mxu0
      %633 = vdwg.mxu0
      %v634 = vld [vmem:[%s538] sm:$0xf]
      %v635 = vld [vmem:[%s538 + $0x4] sm:$0xf]
      %v636 = vld [vmem:[%s538 + $0x8] sm:$0xf]
      %v637 = vld [vmem:[%s538 + $0xc] sm:$0xf]
      %v642 = vunpack.c.l.b16 %v634
      %v643 = vunpack.c.l.b16 %v635
      %v644 = vunpack.c.l.b16 %v636
      %v645 = vunpack.c.l.b16 %v637
      %v646 = vpack.c.b16 %v643, %v642
      %v647 = vpack.c.b16 %v645, %v644
      %v651 = vsel %vm590, %v573, 0
      %653 = vmatprep.subr.bf16.mxu0 0
      %654 = vmatpush1.bf16.msra.mxu0 %v646
      %655 = vmatprep.subr.bf16.mxu0 0
      %656 = vmatpush1.bf16.msra.mxu0 %v647
      %657 = vmatprep.subr.bf16.mxu0 0
      %658 = vmatpush1.bf16.msra.mxu0 0
      %659 = vmatprep.subr.bf16.mxu0 0
      %660 = vmatpush1.bf16.msra.mxu0 0
      %661 = vmatprep.subr.bf16.mxu0 0
      %662 = vmatpush1.bf16.msra.mxu0 0
      %663 = vmatprep.subr.bf16.mxu0 0
      %664 = vmatpush1.bf16.msra.mxu0 0
      %665 = vmatprep.subr.bf16.mxu0 0
      %666 = vmatpush1.bf16.msra.mxu0 0
      %667 = vmatprep.subr.bf16.mxu0 0
      %668 = vmatpush1.bf16.msra.mxu0 0
      %669 = vmatprep.subr.bf16.mxu0 0
      %670 = vmatpush1.bf16.msra.mxu0 0
      %671 = vmatprep.subr.bf16.mxu0 0
      %672 = vmatpush1.bf16.msra.mxu0 0
      %673 = vmatprep.subr.bf16.mxu0 0
      %674 = vmatpush1.bf16.msra.mxu0 0
      %675 = vmatprep.subr.bf16.mxu0 0
      %676 = vmatpush1.bf16.msra.mxu0 0
      %677 = vmatprep.subr.bf16.mxu0 0
      %678 = vmatpush1.bf16.msra.mxu0 0
      %679 = vmatprep.subr.bf16.mxu0 0
      %680 = vmatpush1.bf16.msra.mxu0 0
      %681 = vmatprep.subr.bf16.mxu0 0
      %682 = vmatpush1.bf16.msra.mxu0 0
      %683 = vmatprep.subr.bf16.mxu0 0
      %684 = vmatpush1.bf16.msra.mxu0 0
      %685 = vmatprep.mubr.bf16.mxu0 0
      %686 = vmatmul.mubr.bf16.gmra.mrb[0].mxu0 %v651
      %v687 = vpop.f32.mrb[0].mxu0
      %v688 = vadd.f32 0.0, %v687
      %v689 = vpop.f32.mrb[0].mxu0
      %v690 = vpop.f32.mrb[0].mxu0
      %v691 = vpop.f32.mrb[0].mxu0
      %692 = vdwg.mxu0
      %v693 = vpack.c.bf16 %v688, %v688
      %v694 = vld [vmem:[%s543] sm:$0xf]
      %v695 = vld [vmem:[%s543 + $0x4] sm:$0xf]
      %v696 = vld [vmem:[%s543 + $0x8] sm:$0xf]
      %v697 = vld [vmem:[%s543 + $0xc] sm:$0xf]
      %v702 = vunpack.c.l.b16 %v694
      %v703 = vunpack.c.l.b16 %v695
      %v704 = vunpack.c.l.b16 %v696
      %v705 = vunpack.c.l.b16 %v697
      %v706 = vpack.c.b16 %v703, %v702
      %v707 = vpack.c.b16 %v705, %v704
      %710 = vmatprep.subr.bf16.mxu0 0
      %711 = vmatpush1.bf16.msra.mxu0 %v706
      %712 = vmatprep.subr.bf16.mxu0 0
      %713 = vmatpush1.bf16.msra.mxu0 %v707
      %714 = vmatprep.subr.bf16.mxu0 0
      %715 = vmatpush1.bf16.msra.mxu0 0
      %716 = vmatprep.subr.bf16.mxu0 0
      %717 = vmatpush1.bf16.msra.mxu0 0
      %718 = vmatprep.subr.bf16.mxu0 0
      %719 = vmatpush1.bf16.msra.mxu0 0
      %720 = vmatprep.subr.bf16.mxu0 0
      %721 = vmatpush1.bf16.msra.mxu0 0
      %722 = vmatprep.subr.bf16.mxu0 0
      %723 = vmatpush1.bf16.msra.mxu0 0
      %724 = vmatprep.subr.bf16.mxu0 0
      %725 = vmatpush1.bf16.msra.mxu0 0
      %726 = vmatprep.subr.bf16.mxu0 0
      %727 = vmatpush1.bf16.msra.mxu0 0
      %728 = vmatprep.subr.bf16.mxu0 0
      %729 = vmatpush1.bf16.msra.mxu0 0
      %730 = vmatprep.subr.bf16.mxu0 0
      %731 = vmatpush1.bf16.msra.mxu0 0
      %732 = vmatprep.subr.bf16.mxu0 0
      %733 = vmatpush1.bf16.msra.mxu0 0
      %734 = vmatprep.subr.bf16.mxu0 0
      %735 = vmatpush1.bf16.msra.mxu0 0
      %736 = vmatprep.subr.bf16.mxu0 0
      %737 = vmatpush1.bf16.msra.mxu0 0
      %738 = vmatprep.subr.bf16.mxu0 0
      %739 = vmatpush1.bf16.msra.mxu0 0
      %740 = vmatprep.subr.bf16.mxu0 0
      %741 = vmatpush1.bf16.msra.mxu0 0
      %742 = vmatprep.mubr.bf16.mxu0 0
      %743 = vmatmul.mubr.bf16.gmra.mrb[0].mxu0 %v651
      %v744 = vpop.f32.mrb[0].mxu0
      %v745 = vadd.f32 0.0, %v744
      %v746 = vpop.f32.mrb[0].mxu0
      %v747 = vpop.f32.mrb[0].mxu0
      %v748 = vpop.f32.mrb[0].mxu0
      %749 = vdwg.mxu0
      %v750 = vpack.c.bf16 %v745, %v745
      %v751 = vld [vmem:[%s2] sm:$0xf]
      %v752 = vld [vmem:[%s548] sm:$0xf]
      %v753 = vld [vmem:[%s548 + $0x4] sm:$0xf]
      %v754 = vld [vmem:[%s548 + $0x8] sm:$0xf]
      %v755 = vld [vmem:[%s548 + $0xc] sm:$0xf]
      %v760 = vunpack.c.l.b16 %v752
      %v761 = vunpack.c.l.b16 %v753
      %v762 = vunpack.c.l.b16 %v754
      %v763 = vunpack.c.l.b16 %v755
      %v764 = vpack.c.b16 %v761, %v760
      %v765 = vpack.c.b16 %v763, %v762
      %v769 = vsel %vm590, %v751, 0
      %771 = vmatprep.subr.bf16.mxu0 0
      %772 = vmatpush1.bf16.msra.mxu0 %v764
      %773 = vmatprep.subr.bf16.mxu0 0
      %774 = vmatpush1.bf16.msra.mxu0 %v765
      %775 = vmatprep.subr.bf16.mxu0 0
      %776 = vmatpush1.bf16.msra.mxu0 0
      %777 = vmatprep.subr.bf16.mxu0 0
      %778 = vmatpush1.bf16.msra.mxu0 0
      %779 = vmatprep.subr.bf16.mxu0 0
      %780 = vmatpush1.bf16.msra.mxu0 0
      %781 = vmatprep.subr.bf16.mxu0 0
      %782 = vmatpush1.bf16.msra.mxu0 0
      %783 = vmatprep.subr.bf16.mxu0 0
      %784 = vmatpush1.bf16.msra.mxu0 0
      %785 = vmatprep.subr.bf16.mxu0 0
      %786 = vmatpush1.bf16.msra.mxu0 0
      %787 = vmatprep.subr.bf16.mxu0 0
      %788 = vmatpush1.bf16.msra.mxu0 0
      %789 = vmatprep.subr.bf16.mxu0 0
      %790 = vmatpush1.bf16.msra.mxu0 0
      %791 = vmatprep.subr.bf16.mxu0 0
      %792 = vmatpush1.bf16.msra.mxu0 0
      %793 = vmatprep.subr.bf16.mxu0 0
      %794 = vmatpush1.bf16.msra.mxu0 0
      %795 = vmatprep.subr.bf16.mxu0 0
      %796 = vmatpush1.bf16.msra.mxu0 0
      %797 = vmatprep.subr.bf16.mxu0 0
      %798 = vmatpush1.bf16.msra.mxu0 0
      %799 = vmatprep.subr.bf16.mxu0 0
      %800 = vmatpush1.bf16.msra.mxu0 0
      %801 = vmatprep.subr.bf16.mxu0 0
      %802 = vmatpush1.bf16.msra.mxu0 0
      %803 = vmatprep.mubr.bf16.mxu0 0
      %804 = vmatmul.mubr.bf16.gmra.mrb[0].mxu0 %v769
      %v805 = vpop.f32.mrb[0].mxu0
      %v806 = vadd.f32 0.0, %v805
      %v807 = vpop.f32.mrb[0].mxu0
      %v808 = vpop.f32.mrb[0].mxu0
      %v809 = vpop.f32.mrb[0].mxu0
      %810 = vdwg.mxu0
      %v811 = vpack.c.bf16 %v806, %v806
      %v812 = vld [vmem:[%s551] sm:$0x1]
      %v814 = vlaneseq
      %v815 = vshrl.u32 %v814, 7
      %v816 = vsub.s32 0, %v815
      %v817 = vrot.slane %v812, %v816
      %v819 = vadd.f32 %v629, %v817
      %v820 = vmul.f32 %v819, 0.35355338
      %v821 = vpack.c.bf16 %v820, %v820
      %v822 = vld [vmem:[%s554] sm:$0x1]
      %v824 = vlaneseq
      %v825 = vshrl.u32 %v824, 7
      %v826 = vsub.s32 0, %v825
      %v827 = vrot.slane %v822, %v826
      %v829 = vadd.f32 %v629, %v827
      %v830 = vmul.f32 %v829, 0.35355338
      %v831 = vpack.c.bf16 %v830, %v830
      %vm832 = vcmask 64512
      %v834 = vsel %vm832, %v831, 0
      %v837 = vsel %vm832, %v811, 0
      %839 = vmatprep.subr.bf16.mxu0 0
      %840 = vmatpush1.bf16.xpose.msra.mxu0 %v837
      %841 = vmatprep.subr.bf16.mxu0 0
      %842 = vmatpush1.bf16.xpose.msra.mxu0 0
      %843 = vmatprep.subr.bf16.mxu0 0
      %844 = vmatpush1.bf16.xpose.msra.mxu0 0
      %845 = vmatprep.subr.bf16.mxu0 0
      %846 = vmatpush1.bf16.xpose.msra.mxu0 0
      %847 = vmatprep.subr.bf16.mxu0 0
      %848 = vmatpush1.bf16.xpose.msra.mxu0 0
      %849 = vmatprep.subr.bf16.mxu0 0
      %850 = vmatpush1.bf16.xpose.msra.mxu0 0
      %851 = vmatprep.subr.bf16.mxu0 0
      %852 = vmatpush1.bf16.xpose.msra.mxu0 0
      %853 = vmatprep.subr.bf16.mxu0 0
      %854 = vmatpush1.bf16.xpose.msra.mxu0 0
      %855 = vmatprep.subr.bf16.mxu0 0
      %856 = vmatpush1.bf16.xpose.msra.mxu0 0
      %857 = vmatprep.subr.bf16.mxu0 0
      %858 = vmatpush1.bf16.xpose.msra.mxu0 0
      %859 = vmatprep.subr.bf16.mxu0 0
      %860 = vmatpush1.bf16.xpose.msra.mxu0 0
      %861 = vmatprep.subr.bf16.mxu0 0
      %862 = vmatpush1.bf16.xpose.msra.mxu0 0
      %863 = vmatprep.subr.bf16.mxu0 0
      %864 = vmatpush1.bf16.xpose.msra.mxu0 0
      %865 = vmatprep.subr.bf16.mxu0 0
      %866 = vmatpush1.bf16.xpose.msra.mxu0 0
      %867 = vmatprep.subr.bf16.mxu0 0
      %868 = vmatpush1.bf16.xpose.msra.mxu0 0
      %869 = vmatprep.subr.bf16.mxu0 0
      %870 = vmatpush1.bf16.xpose.msra.mxu0 0
      %871 = vmatprep.mubr.bf16.mxu0 0
      %872 = vmatmul.mubr.bf16.gmra.mrb[0].mxu0 %v834
      %v873 = vpop.f32.mrb[0].mxu0
      %v874 = vadd.f32 0.0, %v873
      %v875 = vpop.f32.mrb[0].mxu0
      %v876 = vpop.f32.mrb[0].mxu0
      %v877 = vpop.f32.mrb[0].mxu0
      %878 = vdwg.mxu0
      %v879 = vlaneseq
      %v880 = vshrl.u32 %v879, 7
      %v881 = vlaneseq
      %v882 = vand.u32 %v881, 127
      %v883 = vsub.s32 7, %v880
      %885 = vrot.lane.b32.xlu0 %v874, 127
      %v886 = vpop.permute.xlu0 %885
      %888 = vrot.lane.b32.xlu0 %v874, 7
      %v889 = vpop.permute.xlu0 %888
      %vm891 = vcmask 56320
      %v892 = vsel %vm891, %v886, %v889
      %v893 = vand.u32 %v883, 1
      %vm894 = vcmp.ne.s32.totalorder %v893, 0
      %v895 = vsel %vm894, %v892, %v874
      %897 = vrot.lane.b32.xlu0 %v895, 126
      %v898 = vpop.permute.xlu0 %897
      %900 = vrot.lane.b32.xlu0 %v895, 6
      %v901 = vpop.permute.xlu0 %900
      %vm903 = vcmask 48128
      %v904 = vsel %vm903, %v898, %v901
      %v905 = vand.u32 %v883, 2
      %vm906 = vcmp.ne.s32.totalorder %v905, 0
      %v907 = vsel %vm906, %v904, %v895
      %909 = vrot.lane.b32.xlu0 %v907, 124
      %v910 = vpop.permute.xlu0 %909
      %912 = vrot.lane.b32.xlu0 %v907, 4
      %v913 = vpop.permute.xlu0 %912
      %vm915 = vcmask 31744
      %v916 = vsel %vm915, %v910, %v913
      %v917 = vand.u32 %v883, 4
      %vm918 = vcmp.ne.s32.totalorder %v917, 0
      %v919 = vsel %vm918, %v916, %v907
      %v920 = vadd.s32 %v882, 7
      %v921 = vsub.s32 %v920, %v880
      %vm922 = vcmp.lt.s32.totalorder %v921, 8
      %v923 = vsel %vm922, %v919, 0.0
      %v925 = vsel %vm832, %v821, 0
      %v928 = vsel %vm832, %v693, 0
      %930 = vmatprep.subr.bf16.mxu0 0
      %931 = vmatpush1.bf16.xpose.msra.mxu0 %v928
      %932 = vmatprep.subr.bf16.mxu0 0
      %933 = vmatpush1.bf16.xpose.msra.mxu0 0
      %934 = vmatprep.subr.bf16.mxu0 0
      %935 = vmatpush1.bf16.xpose.msra.mxu0 0
      %936 = vmatprep.subr.bf16.mxu0 0
      %937 = vmatpush1.bf16.xpose.msra.mxu0 0
      %938 = vmatprep.subr.bf16.mxu0 0
      %939 = vmatpush1.bf16.xpose.msra.mxu0 0
      %940 = vmatprep.subr.bf16.mxu0 0
      %941 = vmatpush1.bf16.xpose.msra.mxu0 0
      %942 = vmatprep.subr.bf16.mxu0 0
      %943 = vmatpush1.bf16.xpose.msra.mxu0 0
      %944 = vmatprep.subr.bf16.mxu0 0
      %945 = vmatpush1.bf16.xpose.msra.mxu0 0
      %946 = vmatprep.subr.bf16.mxu0 0
      %947 = vmatpush1.bf16.xpose.msra.mxu0 0
      %948 = vmatprep.subr.bf16.mxu0 0
      %949 = vmatpush1.bf16.xpose.msra.mxu0 0
      %950 = vmatprep.subr.bf16.mxu0 0
      %951 = vmatpush1.bf16.xpose.msra.mxu0 0
      %952 = vmatprep.subr.bf16.mxu0 0
      %953 = vmatpush1.bf16.xpose.msra.mxu0 0
      %954 = vmatprep.subr.bf16.mxu0 0
      %955 = vmatpush1.bf16.xpose.msra.mxu0 0
      %956 = vmatprep.subr.bf16.mxu0 0
      %957 = vmatpush1.bf16.xpose.msra.mxu0 0
      %958 = vmatprep.subr.bf16.mxu0 0
      %959 = vmatpush1.bf16.xpose.msra.mxu0 0
      %960 = vmatprep.subr.bf16.mxu0 0
      %961 = vmatpush1.bf16.xpose.msra.mxu0 0
      %962 = vmatprep.mubr.bf16.mxu0 0
      %963 = vmatmul.mubr.bf16.gmra.mrb[0].mxu0 %v925
      %v964 = vpop.f32.mrb[0].mxu0
      %v965 = vadd.f32 %v923, %v964
      %v966 = vpop.f32.mrb[0].mxu0
      %v967 = vpop.f32.mrb[0].mxu0
      %v968 = vpop.f32.mrb[0].mxu0
      %969 = vdwg.mxu0
      %vm970 = vcmp.gt.s32.totalorder %v882, %v880
      %v971 = vsel %vm970, -1e+30, %v965
      %v972 = vsel %vm832, %v971, -inf
      %973 = vmax.xlane.f32.xlu0 %v972
      %v974 = vpop.xlane.xlu0 %973
      %v975 = vsub.f32 %v971, %v974
      %v976 = vmul.f32 %v975, 1.442695
      %v977 = vpow.pop %v976
      %v978 = vsel %vm832, %v977, 0.0
      %979 = vadd.xlane.f32.xlu0 %v978
      %v980 = vpop.xlane.xlu0 %979
      %v981 = vrcp.pop %v980
      %v982 = vmul.f32 %v977, %v981
      %v983 = vpack.c.bf16 %v982, %v982
      %v985 = vsel %vm832, %v983, 0
      %vm987 = vcmask 1043456
      %v989 = vsel %vm987, %v750, 0
      %991 = vmatprep.subr.bf16.mxu0 0
      %992 = vmatpush1.bf16.msra.mxu0 %v989
      %993 = vmatprep.subr.bf16.mxu0 0
      %994 = vmatpush1.bf16.msra.mxu0 0
      %995 = vmatprep.subr.bf16.mxu0 0
      %996 = vmatpush1.bf16.msra.mxu0 0
      %997 = vmatprep.subr.bf16.mxu0 0
      %998 = vmatpush1.bf16.msra.mxu0 0
      %999 = vmatprep.subr.bf16.mxu0 0
      %1000 = vmatpush1.bf16.msra.mxu0 0
      %1001 = vmatprep.subr.bf16.mxu0 0
      %1002 = vmatpush1.bf16.msra.mxu0 0
      %1003 = vmatprep.subr.bf16.mxu0 0
      %1004 = vmatpush1.bf16.msra.mxu0 0
      %1005 = vmatprep.subr.bf16.mxu0 0
      %1006 = vmatpush1.bf16.msra.mxu0 0
      %1007 = vmatprep.subr.bf16.mxu0 0
      %1008 = vmatpush1.bf16.msra.mxu0 0
      %1009 = vmatprep.subr.bf16.mxu0 0
      %1010 = vmatpush1.bf16.msra.mxu0 0
      %1011 = vmatprep.subr.bf16.mxu0 0
      %1012 = vmatpush1.bf16.msra.mxu0 0
      %1013 = vmatprep.subr.bf16.mxu0 0
      %1014 = vmatpush1.bf16.msra.mxu0 0
      %1015 = vmatprep.subr.bf16.mxu0 0
      %1016 = vmatpush1.bf16.msra.mxu0 0
      %1017 = vmatprep.subr.bf16.mxu0 0
      %1018 = vmatpush1.bf16.msra.mxu0 0
      %1019 = vmatprep.subr.bf16.mxu0 0
      %1020 = vmatpush1.bf16.msra.mxu0 0
      %1021 = vmatprep.subr.bf16.mxu0 0
      %1022 = vmatpush1.bf16.msra.mxu0 0
      %1023 = vmatprep.mubr.bf16.mxu0 0
      %1024 = vmatmul.mubr.bf16.gmra.mrb[0].mxu0 %v985
      %v1025 = vpop.f32.mrb[0].mxu0
      %v1026 = vadd.f32 0.0, %v1025
      %v1027 = vpop.f32.mrb[0].mxu0
      %v1028 = vpop.f32.mrb[0].mxu0
      %v1029 = vpop.f32.mrb[0].mxu0
      %1030 = vdwg.mxu0
      %v1031 = vld [vmem:[#allocation2] sm:$0xff]
      %v1032 = vpack.c.bf16 %v1026, %v1026
      %v1033 = vld [vmem:[%s558] sm:$0xf]
      %v1035 = vsel %vm832, %v1032, 0
      %v1038 = vsel %vm987, %v1033, 0
      %1040 = vmatprep.subr.bf16.mxu0 0
      %1041 = vmatpush1.bf16.msra.mxu0 %v1038
      %1042 = vmatprep.subr.bf16.mxu0 0
      %1043 = vmatpush1.bf16.msra.mxu0 0
      %1044 = vmatprep.subr.bf16.mxu0 0
      %1045 = vmatpush1.bf16.msra.mxu0 0
      %1046 = vmatprep.subr.bf16.mxu0 0
      %1047 = vmatpush1.bf16.msra.mxu0 0
      %1048 = vmatprep.subr.bf16.mxu0 0
      %1049 = vmatpush1.bf16.msra.mxu0 0
      %1050 = vmatprep.subr.bf16.mxu0 0
      %1051 = vmatpush1.bf16.msra.mxu0 0
      %1052 = vmatprep.subr.bf16.mxu0 0
      %1053 = vmatpush1.bf16.msra.mxu0 0
      %1054 = vmatprep.subr.bf16.mxu0 0
      %1055 = vmatpush1.bf16.msra.mxu0 0
      %1056 = vmatprep.subr.bf16.mxu0 0
      %1057 = vmatpush1.bf16.msra.mxu0 0
      %1058 = vmatprep.subr.bf16.mxu0 0
      %1059 = vmatpush1.bf16.msra.mxu0 0
      %1060 = vmatprep.subr.bf16.mxu0 0
      %1061 = vmatpush1.bf16.msra.mxu0 0
      %1062 = vmatprep.subr.bf16.mxu0 0
      %1063 = vmatpush1.bf16.msra.mxu0 0
      %1064 = vmatprep.subr.bf16.mxu0 0
      %1065 = vmatpush1.bf16.msra.mxu0 0
      %1066 = vmatprep.subr.bf16.mxu0 0
      %1067 = vmatpush1.bf16.msra.mxu0 0
      %1068 = vmatprep.subr.bf16.mxu0 0
      %1069 = vmatpush1.bf16.msra.mxu0 0
      %1070 = vmatprep.subr.bf16.mxu0 0
      %1071 = vmatpush1.bf16.msra.mxu0 0
      %1072 = vmatprep.mubr.bf16.mxu0 0
      %1073 = vmatmul.mubr.bf16.gmra.mrb[0].mxu0 %v1035
      %v1074 = vpop.f32.mrb[0].mxu0
      %v1075 = vadd.f32 0.0, %v1074
      %v1076 = vpop.f32.mrb[0].mxu0
      %v1077 = vpop.f32.mrb[0].mxu0
      %v1078 = vpop.f32.mrb[0].mxu0
      %1079 = vdwg.mxu0
      %v1080 = vadd.f32 %v1031, %v1075
      %1081 = vst.msk [vmem:[#allocation2] sm:$0xff] %vm590, %v1080
      %p1082 = scmp.eq.s32.totalorder %s28, 1
      // Predicated region
      $region73: #{_forward_impl.1} parent=67 // pred_check
        %p1083 = pneg %p1082
      $region74: #{_forward_impl.1} parent=67 // pred_check_branch
        %1085 = sbr.rel (%p1083) target = $region76
      $region75: #{_forward_impl.1} parent=67 // pred_region
        %v1086 = vld [vmem:[%s524] sm:$0xff]
        %v1087 = vld [vmem:[#allocation2] sm:$0xff]
        %v1088 = vadd.f32 %v1086, %v1087
        %v1089 = vsel %vm590, %v1088, 0.0
        %1090 = vadd.xlane.f32.xlu0 %v1089
        %v1091 = vpop.xlane.xlu0 %1090
        %v1092 = vrcp.pop 32.0
        %v1093 = vmul.f32 %v1091, %v1092
        %v1094 = vsub.f32 %v1088, %v1093
        %v1095 = vmul.f32 %v1094, %v1094
        %v1096 = vsel %vm590, %v1095, 0.0
        %1097 = vadd.xlane.f32.xlu0 %v1096
        %v1098 = vpop.xlane.xlu0 %1097
        %v1099 = vmul.f32 %v1098, %v1092
        %v1100 = vadd.f32 %v1099, 1e-05
        %v1101 = vrsqrt.pop %v1100
        %v1102 = vmul.f32 %v1094, %v1101
        %v1103 = vld [vmem:[%s10] sm:$0x1]
        %v1105 = vlaneseq
        %v1106 = vshrl.u32 %v1105, 7
        %v1107 = vsub.s32 0, %v1106
        %v1108 = vrot.slane %v1103, %v1107
        %v1110 = vmul.f32 %v1102, %v1108
        %v1111 = vld [vmem:[%s11] sm:$0x1]
        %v1113 = vlaneseq
        %v1114 = vshrl.u32 %v1113, 7
        %v1115 = vsub.s32 0, %v1114
        %v1116 = vrot.slane %v1111, %v1115
        %v1118 = vadd.f32 %v1110, %v1116
        %1119 = vst.msk [vmem:[%s562] sm:$0xff] %vm590, %v1118
      $region76: #{_forward_impl.1} parent=67 // pred_fallthru
        _
      %p1120 = scmp.lt.s32.totalorder %s27, 1
      %s1121 = scalar_select %p1120, %s27, 1
      %s1122 = smul.addr %s1121, 8
      %s1123 = scalar_lea.vmem %s12, %s1122
      // Predicated region
      $region77: #{_forward_impl.1} parent=67 // pred_check
        %p1124 = pneg %p350
      $region78: #{_forward_impl.1} parent=67 // pred_check_branch
        %1126 = sbr.rel (%p1124) target = $region80
      $region79: #{_forward_impl.1} parent=67 // pred_region
        _
      $region80: #{_forward_impl.1} parent=67 // pred_fallthru
        _
    $region68: #{_forward_impl.1} parent=5 // pred_fallthru
      _
    %p1127 = scmp.le.s32.totalorder 2, %s18
    // Predicated region
    $region81: #{_forward_impl.1} parent=5 // pred_check
      %p1128 = pneg %p1127
    $region82: #{_forward_impl.1} parent=5 // pred_check_branch
      %1130 = sbr.rel (%p1128) target = $region84
    $region83: #{_forward_impl.1} parent=5 // pred_region
      %s1131 = ssub.s32 %s18, 2
      // Predicated region
      $region85: #{_forward_impl.1} parent=83 // pred_check
        %p1132 = pneg %p356
      $region86: #{_forward_impl.1} parent=83 // pred_check_branch
        %1134 = sbr.rel (%p1132) target = $region88
      $region87: #{_forward_impl.1} parent=83 // pred_region
        %p1135 = scmp.lt.s32.totalorder %s29, 1
        %s1136 = scalar_select %p1135, %s29, 1
        %s1137 = smul.addr %s1136, 8
        %s1138 = scalar_lea.vmem %s12, %s1137
      $region88: #{_forward_impl.1} parent=83 // pred_fallthru
        _
    $region84: #{_forward_impl.1} parent=5 // pred_fallthru
      _
  $region6: #{_forward_impl.1} parent=0 // loop_footer
    %s22 = sadd.s32 1, %s18
  $region7: #{_forward_impl.1} parent=0 // loop_footer_branch
    %17 = sbr.rel target = $region3
  $region8: #{_forward_impl.1} parent=0 // loop_exit
    _

</llo_original>
